<compile_context>
chip_gen: v6e
topology: v6e:2x2x1
jax: 0.10.0
libtpu: 0.0.40
codegen_flags: <defaults>
</compile_context>

<pallas_src>
import jax
import jax.numpy as jnp
from jax.experimental import pallas as pl
from jax.experimental.pallas import tpu as pltpu

# ---------------- config (small synthetic shapes) ----------------
PATCH = 4              # synthetic patch-embed stride
HIDDEN = 32            # synthetic hidden width (per patch)
OUT_SIZE = 560         # interpolate(..., size=(560, 560), align_corners=True)
CROP = 67              # outputs[..., 67:-67, :]
R_OUT = OUT_SIZE - 2 * CROP   # 426 rows actually produced


# ---------------- fused Pallas kernel ----------------
def _fused_dpt_kernel(x_ref, w1_ref, b1_ref, w2_ref, b2_ref, w3_ref,
                      colmask_ref, rowsel_ref, ry_ref, rxT_ref, b3_ref, o_ref):
    """Per batch element (all matmuls bf16 operands, f32 accumulation):
         depth head (dense, patch-flat layout):
           H1 = relu(X @ W1 + b1)        (144, 32)
           H2 = relu(H1 @ W2 + b2)       (144, 32)
           d  = H2 @ W3                  (144, 1)
         un-flatten to (Hp, Wp) via mask + tiny matmul (no in-kernel reshape):
           D  = rowsel @ (d * colmask)   (12, 12)
         resize (reassociated, lane-dense intermediates) + crop (in Ry) + b3:
           t  = D @ Rx^T                 (12, 560)
           O  = Ry_crop @ t + b3         (426, 560)
    """
    x = x_ref[0]                                                     # (HpWp, F) bf16
    h = jnp.dot(x, w1_ref[...], preferred_element_type=jnp.float32) + b1_ref[...]
    h = jnp.maximum(h, 0.0).astype(jnp.bfloat16)
    h = jnp.dot(h, w2_ref[...], preferred_element_type=jnp.float32) + b2_ref[...]
    h = jnp.maximum(h, 0.0).astype(jnp.bfloat16)
    d = jnp.dot(h, w3_ref[...], preferred_element_type=jnp.float32)  # (HpWp, 1) f32

    dm = d.astype(jnp.bfloat16) * colmask_ref[...]                   # (HpWp, Wp) bf16
    dsq = jnp.dot(rowsel_ref[...], dm,
                  preferred_element_type=jnp.float32)                # (Hp, Wp) f32

    t = jnp.dot(dsq.astype(jnp.bfloat16), rxT_ref[...],
                preferred_element_type=jnp.float32)                  # (Hp, 560) f32
    o = jnp.dot(ry_ref[...], t.astype(jnp.bfloat16),
                preferred_element_type=jnp.float32)                  # (426, 560) f32
    o_ref[0] = o + b3_ref[0, 0]                                      # scalar from SMEM


# ---------------- glue (plain JAX) ----------------
def _bilinear_matrix(out_size, in_size):
    """Row-interpolation matrix R (out_size, in_size), bilinear, align_corners=True."""
    i = jnp.arange(out_size, dtype=jnp.float32)
    if out_size == 1:
        src = jnp.zeros((out_size,), jnp.float32)
    else:
        src = i * (in_size - 1) / (out_size - 1)
    i0 = jnp.clip(jnp.floor(src).astype(jnp.int32), 0, in_size - 1)
    i1 = jnp.clip(i0 + 1, 0, in_size - 1)
    frac = src - i0.astype(jnp.float32)
    oh0 = jax.nn.one_hot(i0, in_size, dtype=jnp.float32)
    oh1 = jax.nn.one_hot(i1, in_size, dtype=jnp.float32)
    return oh0 * (1.0 - frac)[:, None] + oh1 * frac[:, None]


def dpt_forward(x, params):
    """x: NCHW float32 (B, 3, H, W).  Returns NCHW (B, 1, 426, 560)."""
    B, Cin, H, W = x.shape
    Hp, Wp = H // PATCH, W // PATCH
    F = PATCH * PATCH * Cin          # per-patch feature size
    HpWp = Hp * Wp                   # number of patches

    # --- patch extraction: NCHW -> (B, Hp*Wp, F); feature order = (py, px, c) ---
    xh = jnp.transpose(x, (0, 2, 3, 1))                             # (B, H, W, C)
    p = xh.reshape(B, Hp, PATCH, Wp, PATCH, Cin)
    p = jnp.transpose(p, (0, 1, 3, 2, 4, 5))                        # (B, Hp, Wp, P, P, C)
    xflat = p.reshape(B, HpWp, F).astype(jnp.bfloat16)              # (B, HpWp, F) bf16

    # --- dense depth-head weights (bf16 MXU operands, f32 biases) ---
    w1, b1, w2, b2, w3, b3 = params
    w1b = w1.astype(jnp.bfloat16)                                   # (F, HIDDEN)
    w2b = w2.astype(jnp.bfloat16)                                   # (HIDDEN, HIDDEN)
    w3b = w3.astype(jnp.bfloat16)                                   # (HIDDEN, 1)

    # --- un-flatten helpers: D = rowsel @ (d * colmask) gives (Hp, Wp) exactly ---
    pidx = jnp.arange(HpWp)
    colmask = (pidx[:, None] % Wp == jnp.arange(Wp)[None, :]
               ).astype(jnp.bfloat16)                               # (HpWp, Wp)
    rowsel = (pidx[None, :] // Wp == jnp.arange(Hp)[:, None]
              ).astype(jnp.bfloat16)                                # (Hp, HpWp)

    # --- bilinear matrices; row crop folded into Ry; bf16 for the MXU ---
    ry = _bilinear_matrix(OUT_SIZE, Hp)[CROP:OUT_SIZE - CROP].astype(jnp.bfloat16)  # (426, Hp)
    rxT = _bilinear_matrix(OUT_SIZE, Wp).T.astype(jnp.bfloat16)                     # (Wp, 560)

    flops = 2 * B * (HpWp * F * HIDDEN + HpWp * HIDDEN * HIDDEN + HpWp * HIDDEN * 1
                     + Hp * HpWp * Wp + Hp * Wp * OUT_SIZE + R_OUT * Hp * OUT_SIZE)
    bytes_accessed = (2 * (B * HpWp * F                                   # bf16 input
                           + F * HIDDEN + HIDDEN * HIDDEN + HIDDEN       # bf16 weights
                           + HpWp * Wp + Hp * HpWp                       # bf16 masks
                           + R_OUT * Hp + Wp * OUT_SIZE)                 # bf16 Ry / RxT
                      + 4 * (2 * HIDDEN + 1)                             # f32 biases
                      + 4 * (B * R_OUT * OUT_SIZE))                      # f32 output

    out = pl.pallas_call(
        _fused_dpt_kernel,
        out_shape=jax.ShapeDtypeStruct((B, R_OUT, OUT_SIZE), jnp.float32),
        grid=(B,),
        in_specs=[
            pl.BlockSpec((1, HpWp, F), lambda b: (b, 0, 0)),        # patches (per batch)
            pl.BlockSpec((F, HIDDEN), lambda b: (0, 0)),            # W1 (dense)
            pl.BlockSpec((1, HIDDEN), lambda b: (0, 0)),            # b1 (f32)
            pl.BlockSpec((HIDDEN, HIDDEN), lambda b: (0, 0)),       # W2 (dense)
            pl.BlockSpec((1, HIDDEN), lambda b: (0, 0)),            # b2 (f32)
            pl.BlockSpec((HIDDEN, 1), lambda b: (0, 0)),            # W3 (dense)
            pl.BlockSpec((HpWp, Wp), lambda b: (0, 0)),             # colmask
            pl.BlockSpec((Hp, HpWp), lambda b: (0, 0)),             # rowsel
            pl.BlockSpec((R_OUT, Hp), lambda b: (0, 0)),            # Ry (crop folded)
            pl.BlockSpec((Wp, OUT_SIZE), lambda b: (0, 0)),         # Rx^T
            pl.BlockSpec(memory_space=pltpu.MemorySpace.SMEM),      # b3 scalar in SMEM
        ],
        out_specs=pl.BlockSpec((1, R_OUT, OUT_SIZE), lambda b: (b, 0, 0)),
        compiler_params=pltpu.CompilerParams(dimension_semantics=("parallel",)),
        cost_estimate=pl.CostEstimate(flops=flops, transcendentals=0,
                                      bytes_accessed=bytes_accessed),
    )(xflat, w1b, b1, w2b, b2, w3b, colmask, rowsel, ry, rxT, b3)

    # only a leading size-1 channel dim added (metadata reshape, no crop pass)
    return out[:, None, :, :]                                       # (B, 1, 426, 560)


def make_params(key, cin=3):
    in_dim = PATCH * PATCH * cin
    k1, k2, k3 = jax.random.split(key, 3)
    w1 = jax.random.normal(k1, (in_dim, HIDDEN), jnp.float32) * 0.05
    b1 = jnp.zeros((1, HIDDEN), jnp.float32)
    w2 = jax.random.normal(k2, (HIDDEN, HIDDEN), jnp.float32) * 0.05
    b2 = jnp.zeros((1, HIDDEN), jnp.float32)
    w3 = jax.random.normal(k3, (HIDDEN, 1), jnp.float32) * 0.05
    b3 = jnp.zeros((1, 1), jnp.float32)
    return (w1, b1, w2, b2, w3, b3)


if __name__ == "__main__":
    key = jax.random.PRNGKey(0)
    kx, kp = jax.random.split(key)
    B, Cin, H, W = 2, 3, 48, 48
    x = jax.random.normal(kx, (B, Cin, H, W), dtype=jnp.float32)
    params = make_params(kp, Cin)

    out = dpt_forward(x, params)
    out = jax.block_until_ready(out)

    assert out.shape == (B, 1, R_OUT, OUT_SIZE), out.shape
    assert out.dtype == jnp.float32
    assert bool(jnp.all(jnp.isfinite(out)))
    print("KERNEL_OK")
</pallas_src>

<mosaic_0001>
module attributes {stable_mosaic.version = 11 : i64} {
  func.func @_fused_dpt_kernel(%arg0: i32, %arg1: memref<1x144x48xbf16, #tpu.memory_space<vmem>>, %arg2: memref<48x32xbf16, #tpu.memory_space<vmem>>, %arg3: memref<1x32xf32, #tpu.memory_space<vmem>>, %arg4: memref<32x32xbf16, #tpu.memory_space<vmem>>, %arg5: memref<1x32xf32, #tpu.memory_space<vmem>>, %arg6: memref<32x1xbf16, #tpu.memory_space<vmem>>, %arg7: memref<144x12xbf16, #tpu.memory_space<vmem>>, %arg8: memref<12x144xbf16, #tpu.memory_space<vmem>>, %arg9: memref<426x12xbf16, #tpu.memory_space<vmem>>, %arg10: memref<12x560xbf16, #tpu.memory_space<vmem>>, %arg11: memref<1x1xf32, #tpu.memory_space<smem>>, %arg12: memref<1x426x560xf32, #tpu.memory_space<vmem>>) attributes {dimension_semantics = [#tpu.dimension_semantics<parallel>], iteration_bounds = array<i64: 2>, scalar_prefetch = 0 : i64, scratch_operands = 0 : i64, tpu.core_type = #tpu.core_type<tc>, window_params = [{transform_indices = @transform_0, window_bounds = array<i64: 1, 144, 48>}, {pipeline_mode = #tpu.pipeline_mode<synchronous>, transform_indices = @transform_1, window_bounds = array<i64: 48, 32>}, {pipeline_mode = #tpu.pipeline_mode<synchronous>, transform_indices = @transform_2, window_bounds = array<i64: 1, 32>}, {pipeline_mode = #tpu.pipeline_mode<synchronous>, transform_indices = @transform_3, window_bounds = array<i64: 32, 32>}, {pipeline_mode = #tpu.pipeline_mode<synchronous>, transform_indices = @transform_4, window_bounds = array<i64: 1, 32>}, {pipeline_mode = #tpu.pipeline_mode<synchronous>, transform_indices = @transform_5, window_bounds = array<i64: 32, 1>}, {pipeline_mode = #tpu.pipeline_mode<synchronous>, transform_indices = @transform_6, window_bounds = array<i64: 144, 12>}, {pipeline_mode = #tpu.pipeline_mode<synchronous>, transform_indices = @transform_7, window_bounds = array<i64: 12, 144>}, {pipeline_mode = #tpu.pipeline_mode<synchronous>, transform_indices = @transform_8, window_bounds = array<i64: 426, 12>}, {pipeline_mode = #tpu.pipeline_mode<synchronous>, transform_indices = @transform_9, window_bounds = array<i64: 12, 560>}, {transform_indices = @transform_10, window_bounds = array<i64: 1, 1>}, {transform_indices = @transform_11, window_bounds = array<i64: 1, 426, 560>}]} {
    %c0 = arith.constant 0 : index
    %c0_0 = arith.constant 0 : index
    %c0_1 = arith.constant 0 : index
    %0 = vector.load %arg1[%c0, %c0_0, %c0_1] : memref<1x144x48xbf16, #tpu.memory_space<vmem>>, vector<1x144x48xbf16>
    %1 = vector.shape_cast %0 : vector<1x144x48xbf16> to vector<144x48xbf16>
    %c0_2 = arith.constant 0 : index
    %c0_3 = arith.constant 0 : index
    %2 = vector.load %arg2[%c0_2, %c0_3] : memref<48x32xbf16, #tpu.memory_space<vmem>>, vector<48x32xbf16>
    %cst = arith.constant dense<0.000000e+00> : vector<144x32xf32>
    %3 = tpu.matmul %1, %2, %cst {dimension_numbers = #tpu.dot_dimension_numbers<[1], [0], [0], [1], [0, 0, 1, 1], [], []>} : vector<144x48xbf16>, vector<48x32xbf16>, vector<144x32xf32> -> vector<144x32xf32>
    %c0_4 = arith.constant 0 : index
    %c0_5 = arith.constant 0 : index
    %4 = vector.load %arg3[%c0_4, %c0_5] : memref<1x32xf32, #tpu.memory_space<vmem>>, vector<1x32xf32>
    %5 = vector.broadcast %4 : vector<1x32xf32> to vector<144x32xf32>
    %6 = arith.addf %3, %5 : vector<144x32xf32>
    %cst_6 = arith.constant 0.000000e+00 : f32
    %7 = vector.broadcast %cst_6 : f32 to vector<144x32xf32>
    %8 = arith.maximumf %6, %7 : vector<144x32xf32>
    %9 = arith.truncf %8 : vector<144x32xf32> to vector<144x32xbf16>
    %c0_7 = arith.constant 0 : index
    %c0_8 = arith.constant 0 : index
    %10 = vector.load %arg4[%c0_7, %c0_8] : memref<32x32xbf16, #tpu.memory_space<vmem>>, vector<32x32xbf16>
    %cst_9 = arith.constant dense<0.000000e+00> : vector<144x32xf32>
    %11 = tpu.matmul %9, %10, %cst_9 {dimension_numbers = #tpu.dot_dimension_numbers<[1], [0], [0], [1], [0, 0, 1, 1], [], []>} : vector<144x32xbf16>, vector<32x32xbf16>, vector<144x32xf32> -> vector<144x32xf32>
    %c0_10 = arith.constant 0 : index
    %c0_11 = arith.constant 0 : index
    %12 = vector.load %arg5[%c0_10, %c0_11] : memref<1x32xf32, #tpu.memory_space<vmem>>, vector<1x32xf32>
    %13 = vector.broadcast %12 : vector<1x32xf32> to vector<144x32xf32>
    %14 = arith.addf %11, %13 : vector<144x32xf32>
    %cst_12 = arith.constant 0.000000e+00 : f32
    %15 = vector.broadcast %cst_12 : f32 to vector<144x32xf32>
    %16 = arith.maximumf %14, %15 : vector<144x32xf32>
    %17 = arith.truncf %16 : vector<144x32xf32> to vector<144x32xbf16>
    %c0_13 = arith.constant 0 : index
    %c0_14 = arith.constant 0 : index
    %18 = vector.load %arg6[%c0_13, %c0_14] : memref<32x1xbf16, #tpu.memory_space<vmem>>, vector<32x1xbf16>
    %cst_15 = arith.constant dense<0.000000e+00> : vector<144x1xf32>
    %19 = tpu.matmul %17, %18, %cst_15 {dimension_numbers = #tpu.dot_dimension_numbers<[1], [0], [0], [1], [0, 0, 1, 1], [], []>} : vector<144x32xbf16>, vector<32x1xbf16>, vector<144x1xf32> -> vector<144x1xf32>
    %20 = arith.truncf %19 : vector<144x1xf32> to vector<144x1xbf16>
    %c0_16 = arith.constant 0 : index
    %c0_17 = arith.constant 0 : index
    %21 = vector.load %arg7[%c0_16, %c0_17] : memref<144x12xbf16, #tpu.memory_space<vmem>>, vector<144x12xbf16>
    %22 = vector.broadcast %20 : vector<144x1xbf16> to vector<144x12xbf16>
    %23 = arith.mulf %22, %21 : vector<144x12xbf16>
    %c0_18 = arith.constant 0 : index
    %c0_19 = arith.constant 0 : index
    %24 = vector.load %arg8[%c0_18, %c0_19] : memref<12x144xbf16, #tpu.memory_space<vmem>>, vector<12x144xbf16>
    %cst_20 = arith.constant dense<0.000000e+00> : vector<12x12xf32>
    %25 = tpu.matmul %24, %23, %cst_20 {dimension_numbers = #tpu.dot_dimension_numbers<[1], [0], [0], [1], [0, 0, 1, 1], [], []>} : vector<12x144xbf16>, vector<144x12xbf16>, vector<12x12xf32> -> vector<12x12xf32>
    %26 = arith.truncf %25 : vector<12x12xf32> to vector<12x12xbf16>
    %c0_21 = arith.constant 0 : index
    %c0_22 = arith.constant 0 : index
    %27 = vector.load %arg10[%c0_21, %c0_22] : memref<12x560xbf16, #tpu.memory_space<vmem>>, vector<12x560xbf16>
    %cst_23 = arith.constant dense<0.000000e+00> : vector<12x560xf32>
    %28 = tpu.matmul %26, %27, %cst_23 {dimension_numbers = #tpu.dot_dimension_numbers<[1], [0], [0], [1], [0, 0, 1, 1], [], []>} : vector<12x12xbf16>, vector<12x560xbf16>, vector<12x560xf32> -> vector<12x560xf32>
    %c0_24 = arith.constant 0 : index
    %c0_25 = arith.constant 0 : index
    %29 = vector.load %arg9[%c0_24, %c0_25] : memref<426x12xbf16, #tpu.memory_space<vmem>>, vector<426x12xbf16>
    %30 = arith.truncf %28 : vector<12x560xf32> to vector<12x560xbf16>
    %cst_26 = arith.constant dense<0.000000e+00> : vector<426x560xf32>
    %31 = tpu.matmul %29, %30, %cst_26 {dimension_numbers = #tpu.dot_dimension_numbers<[1], [0], [0], [1], [0, 0, 1, 1], [], []>} : vector<426x12xbf16>, vector<12x560xbf16>, vector<426x560xf32> -> vector<426x560xf32>
    %c0_27 = arith.constant 0 : index
    %c0_28 = arith.constant 0 : index
    %32 = memref.load %arg11[%c0_27, %c0_28] : memref<1x1xf32, #tpu.memory_space<smem>>
    %33 = vector.broadcast %32 : f32 to vector<426x560xf32>
    %34 = arith.addf %31, %33 : vector<426x560xf32>
    %c0_29 = arith.constant 0 : index
    %c0_30 = arith.constant 0 : index
    %c0_31 = arith.constant 0 : index
    %35 = vector.load %arg12[%c0_29, %c0_30, %c0_31] : memref<1x426x560xf32, #tpu.memory_space<vmem>>, vector<1x426x560xf32>
    %36 = vector.shape_cast %35 : vector<1x426x560xf32> to vector<426x560xf32>
    %37 = vector.shape_cast %34 : vector<426x560xf32> to vector<1x426x560xf32>
    tpu.vector_store %arg12[%c0_29, %c0_30, %c0_31], %37 {strides = array<i32>} : memref<1x426x560xf32, #tpu.memory_space<vmem>>, vector<1x426x560xf32>,
    return
  }
  func.func @transform_0(%arg0: i32) -> (i32, i32, i32) {
    %c0_i32 = arith.constant 0 : i32
    %c0_i32_0 = arith.constant 0 : i32
    %c0_i32_1 = arith.constant 0 : i32
    return %arg0, %c0_i32, %c0_i32_0 : i32, i32, i32
  }
  func.func @transform_1(%arg0: i32) -> (i32, i32) {
    %c0_i32 = arith.constant 0 : i32
    %c0_i32_0 = arith.constant 0 : i32
    %c0_i32_1 = arith.constant 0 : i32
    return %c0_i32, %c0_i32_0 : i32, i32
  }
  func.func @transform_2(%arg0: i32) -> (i32, i32) {
    %c0_i32 = arith.constant 0 : i32
    %c0_i32_0 = arith.constant 0 : i32
    %c0_i32_1 = arith.constant 0 : i32
    return %c0_i32, %c0_i32_0 : i32, i32
  }
  func.func @transform_3(%arg0: i32) -> (i32, i32) {
    %c0_i32 = arith.constant 0 : i32
    %c0_i32_0 = arith.constant 0 : i32
    %c0_i32_1 = arith.constant 0 : i32
    return %c0_i32, %c0_i32_0 : i32, i32
  }
  func.func @transform_4(%arg0: i32) -> (i32, i32) {
    %c0_i32 = arith.constant 0 : i32
    %c0_i32_0 = arith.constant 0 : i32
    %c0_i32_1 = arith.constant 0 : i32
    return %c0_i32, %c0_i32_0 : i32, i32
  }
  func.func @transform_5(%arg0: i32) -> (i32, i32) {
    %c0_i32 = arith.constant 0 : i32
    %c0_i32_0 = arith.constant 0 : i32
    %c0_i32_1 = arith.constant 0 : i32
    return %c0_i32, %c0_i32_0 : i32, i32
  }
  func.func @transform_6(%arg0: i32) -> (i32, i32) {
    %c0_i32 = arith.constant 0 : i32
    %c0_i32_0 = arith.constant 0 : i32
    %c0_i32_1 = arith.constant 0 : i32
    return %c0_i32, %c0_i32_0 : i32, i32
  }
  func.func @transform_7(%arg0: i32) -> (i32, i32) {
    %c0_i32 = arith.constant 0 : i32
    %c0_i32_0 = arith.constant 0 : i32
    %c0_i32_1 = arith.constant 0 : i32
    return %c0_i32, %c0_i32_0 : i32, i32
  }
  func.func @transform_8(%arg0: i32) -> (i32, i32) {
    %c0_i32 = arith.constant 0 : i32
    %c0_i32_0 = arith.constant 0 : i32
    %c0_i32_1 = arith.constant 0 : i32
    return %c0_i32, %c0_i32_0 : i32, i32
  }
  func.func @transform_9(%arg0: i32) -> (i32, i32) {
    %c0_i32 = arith.constant 0 : i32
    %c0_i32_0 = arith.constant 0 : i32
    %c0_i32_1 = arith.constant 0 : i32
    return %c0_i32, %c0_i32_0 : i32, i32
  }
  func.func @transform_10(%arg0: i32) -> (i32, i32) {
    %c0_i32 = arith.constant 0 : i32
    %c0_i32_0 = arith.constant 0 : i32
    %c0_i32_1 = arith.constant 0 : i32
    return %c0_i32, %c0_i32_0 : i32, i32
  }
  func.func @transform_11(%arg0: i32) -> (i32, i32, i32) {
    %c0_i32 = arith.constant 0 : i32
    %c0_i32_0 = arith.constant 0 : i32
    %c0_i32_1 = arith.constant 0 : i32
    return %arg0, %c0_i32, %c0_i32_0 : i32, i32, i32
  }
}

</mosaic_0001>

<llo_original>
// kernel: tpu_custom_call.1
$region0: #{tpu_custom_call.1}
  #allocation0 [shape = 'u32[]', space=smem, size = 0x4, offset = 0x4, fixed_abs, tag = 'smem constant byte address 0x4 - core index']
  #allocation1 [shape = 'u32[144,128]{1,0:T(1,128)}', space=vmem, size = 0x12000, scoped, tag = 'internal scratch']
  #allocation2 [shape = 'f32[1,1]{1,0:T(1,128)S(6)}', space=smem, size = 0x200, scoped, tag = 'scoped memory for tpu_custom_call.1']
  %s0 = inlined_call_operand.vmem [shape: bf16[2,144,48], index: 0, kind: input, shape index: {}]
  %s1 = inlined_call_operand.vmem [shape: bf16[48,32], index: 1, kind: input, shape index: {}]
  %s2 = inlined_call_operand.hbm [shape: f32[1,32], index: 2, kind: input, shape index: {}]
  %s3 = inlined_call_operand.hbm [shape: bf16[32,32], index: 3, kind: input, shape index: {}]
  %s4 = inlined_call_operand.hbm [shape: f32[1,32], index: 4, kind: input, shape index: {}]
  %s5 = inlined_call_operand.vmem [shape: bf16[32,1], index: 5, kind: input, shape index: {}]
  %s6 = inlined_call_operand.vmem [shape: bf16[144,12], index: 6, kind: input, shape index: {}]
  %s7 = inlined_call_operand.hbm [shape: bf16[12,144], index: 7, kind: input, shape index: {}]
  %s8 = inlined_call_operand.vmem [shape: bf16[426,12], index: 8, kind: input, shape index: {}]
  %s9 = inlined_call_operand.hbm [shape: bf16[12,560], index: 9, kind: input, shape index: {}]
  %s10 = inlined_call_operand.<no memory space> [shape: f32[1,1], index: 10, kind: input, shape index: {}]
  %s11 = inlined_call_operand.vmem [shape: f32[2,426,560], index: 11, kind: output, shape index: {}]
  %s12 = sld [smem:[#allocation0]]
  $region97: #{tpu_custom_call.1} parent=0
    _
  %s14 = ssub.s32 1, %s12
  %s15 = scalar_select 0, %s14, %s12
  %16 = sst [smem:[#allocation2]] %s10
  $region1: #{tpu_custom_call.1} parent=0
    #allocation3 [shape = 'u8[512]{0}', space=vmem, size = 0x400, scoped, tag = 'input window, operand 2, single buffered']
    #allocation4 [shape = 's32[2]{0}', space=sflag, size = 0x8, scoped, tag = 'scoped memory for tpu_custom_call.1']
    #allocation5 [shape = 'u8[8192]{0}', space=vmem, size = 0x2000, scoped, tag = 'input window, operand 3, single buffered']
    #allocation6 [shape = 's32[1]{0}', space=sflag, size = 0x4, scoped, tag = 'scoped memory for tpu_custom_call.1']
    #allocation7 [shape = 'u8[512]{0}', space=vmem, size = 0x400, scoped, tag = 'input window, operand 4, single buffered']
    #allocation8 [shape = 'u8[8192]{0}', space=vmem, size = 0x2000, scoped, tag = 'input window, operand 7, single buffered']
    #allocation9 [shape = 's32[1]{0}', space=sflag, size = 0x4, scoped, tag = 'scoped memory for tpu_custom_call.1']
    #allocation10 [shape = 'u8[20480]{0}', space=vmem, size = 0x5000, scoped, tag = 'input window, operand 9, single buffered']
    %17 = vsyncpa [#allocation4], 0
    %18 = vsyncpa [#allocation6], 0
    %19 = vsyncpa [#allocation9], 0
    loop: start=0, step=1, limit=4
    $region2: #{tpu_custom_call.1} parent=1 // loop_pre_header
      _
    $region3: #{tpu_custom_call.1} parent=1 // loop_header
      %s21 = sphi 0, %s25
      %p22 = scmp.ge.s32.totalorder %s21, 4
      %s31 = sphi 0, %s33
      %s34 = sphi 0, %s31
      %s35 = sphi 0, %s34
      %s51 = sphi 0, %s35
      %s55 = sphi 0, %s55
      %s57 = sphi 0, %s55
      %s58 = sphi 0, %s57
      %s72 = sphi 0, %s58
      %s76 = sphi 0, %s76
      %s78 = sphi 0, %s76
      %s79 = sphi 0, %s78
      %s93 = sphi 0, %s79
      %s97 = sphi 0, %s97
      %s99 = sphi 0, %s97
      %s100 = sphi 0, %s99
      %s114 = sphi 0, %s100
      %s118 = sphi 0, %s118
      %s120 = sphi 0, %s118
      %s121 = sphi 0, %s120
      %s135 = sphi 0, %s121
      %s139 = sphi 0, %s139
      %s141 = sphi 0, %s139
      %s142 = sphi 0, %s141
      %s156 = sphi 0, %s142
      %s160 = sphi 0, %s160
      %s162 = sphi 0, %s160
      %s163 = sphi 0, %s162
      %s177 = sphi 0, %s163
      %s181 = sphi 0, %s181
      %s183 = sphi 0, %s181
      %s184 = sphi 0, %s183
      %s198 = sphi 0, %s184
      %s202 = sphi 0, %s202
      %s204 = sphi 0, %s202
      %s205 = sphi 0, %s204
      %s219 = sphi 0, %s205
      %s223 = sphi 0, %s223
      %s225 = sphi 0, %s223
      %s226 = sphi 0, %s225
      %s240 = sphi 0, %s226
      %s244 = sphi 0, %s244
      %s246 = sphi 0, %s244
      %s247 = sphi 0, %s246
      %s261 = sphi 0, %s247
      %s267 = sphi 0, %s269
      %s270 = sphi 0, %s267
      %s271 = sphi 0, %s270
      %s287 = sphi 0, %s271
    $region4: #{tpu_custom_call.1} parent=1 // loop_header_branch
      %24 = sbr.rel (%p22) target = $region8
    $region5: #{tpu_custom_call.1} parent=1 // loop_body
      %s26 = ssub.s32 %s21, 1
      %s27 = ssub.s32 %s21, 2
      %s28 = sadd.s32 %s21, 1
      %s29 = ssub.s32 %s21, %s28
      %p30 = scmp.eq.s32.totalorder %s29, 0
      %s32 = sadd.s32 %s31, 1
      %s33 = scalar_select %p30, %s31, %s32
      %p36 = pneg %p30
      %p37 = scmp.eq.s32.totalorder %s21, 1
      %p38 = por %p36, %p37
      %p39 = scmp.ne.s32.totalorder %s31, %s34
      %p40 = scmp.eq.s32.totalorder %s21, 0
      %p41 = por %p39, %p40
      %p42 = scmp.ne.s32.totalorder %s31, %s34
      %p43 = scmp.eq.s32.totalorder %s26, 1
      %p44 = por %p42, %p43
      %p45 = scmp.ne.s32.totalorder %s34, %s35
      %p46 = scmp.eq.s32.totalorder %s26, 0
      %p47 = por %p45, %p46
      %p48 = scmp.ne.s32.totalorder %s34, %s35
      %p49 = scmp.eq.s32.totalorder %s27, 1
      %p50 = por %p48, %p49
      %p52 = scmp.ne.s32.totalorder %s35, %s51
      %p53 = scmp.eq.s32.totalorder %s27, 0
      %p54 = por %p52, %p53
      %s56 = sadd.s32 %s55, 1
      %p59 = scmp.eq.s32.totalorder %s21, 1
      %p60 = scmp.ne.s32.totalorder %s55, %s57
      %p61 = scmp.eq.s32.totalorder %s21, 0
      %p62 = por %p60, %p61
      %p63 = scmp.ne.s32.totalorder %s55, %s57
      %p64 = scmp.eq.s32.totalorder %s26, 1
      %p65 = por %p63, %p64
      %p66 = scmp.ne.s32.totalorder %s57, %s58
      %p67 = scmp.eq.s32.totalorder %s26, 0
      %p68 = por %p66, %p67
      %p69 = scmp.ne.s32.totalorder %s57, %s58
      %p70 = scmp.eq.s32.totalorder %s27, 1
      %p71 = por %p69, %p70
      %p73 = scmp.ne.s32.totalorder %s58, %s72
      %p74 = scmp.eq.s32.totalorder %s27, 0
      %p75 = por %p73, %p74
      %s77 = sadd.s32 %s76, 1
      %p80 = scmp.eq.s32.totalorder %s21, 1
      %p81 = scmp.ne.s32.totalorder %s76, %s78
      %p82 = scmp.eq.s32.totalorder %s21, 0
      %p83 = por %p81, %p82
      %p84 = scmp.ne.s32.totalorder %s76, %s78
      %p85 = scmp.eq.s32.totalorder %s26, 1
      %p86 = por %p84, %p85
      %p87 = scmp.ne.s32.totalorder %s78, %s79
      %p88 = scmp.eq.s32.totalorder %s26, 0
      %p89 = por %p87, %p88
      %p90 = scmp.ne.s32.totalorder %s78, %s79
      %p91 = scmp.eq.s32.totalorder %s27, 1
      %p92 = por %p90, %p91
      %p94 = scmp.ne.s32.totalorder %s79, %s93
      %p95 = scmp.eq.s32.totalorder %s27, 0
      %p96 = por %p94, %p95
      %s98 = sadd.s32 %s97, 1
      %p101 = scmp.eq.s32.totalorder %s21, 1
      %p102 = scmp.ne.s32.totalorder %s97, %s99
      %p103 = scmp.eq.s32.totalorder %s21, 0
      %p104 = por %p102, %p103
      %p105 = scmp.ne.s32.totalorder %s97, %s99
      %p106 = scmp.eq.s32.totalorder %s26, 1
      %p107 = por %p105, %p106
      %p108 = scmp.ne.s32.totalorder %s99, %s100
      %p109 = scmp.eq.s32.totalorder %s26, 0
      %p110 = por %p108, %p109
      %p111 = scmp.ne.s32.totalorder %s99, %s100
      %p112 = scmp.eq.s32.totalorder %s27, 1
      %p113 = por %p111, %p112
      %p115 = scmp.ne.s32.totalorder %s100, %s114
      %p116 = scmp.eq.s32.totalorder %s27, 0
      %p117 = por %p115, %p116
      %s119 = sadd.s32 %s118, 1
      %p122 = scmp.eq.s32.totalorder %s21, 1
      %p123 = scmp.ne.s32.totalorder %s118, %s120
      %p124 = scmp.eq.s32.totalorder %s21, 0
      %p125 = por %p123, %p124
      %p126 = scmp.ne.s32.totalorder %s118, %s120
      %p127 = scmp.eq.s32.totalorder %s26, 1
      %p128 = por %p126, %p127
      %p129 = scmp.ne.s32.totalorder %s120, %s121
      %p130 = scmp.eq.s32.totalorder %s26, 0
      %p131 = por %p129, %p130
      %p132 = scmp.ne.s32.totalorder %s120, %s121
      %p133 = scmp.eq.s32.totalorder %s27, 1
      %p134 = por %p132, %p133
      %p136 = scmp.ne.s32.totalorder %s121, %s135
      %p137 = scmp.eq.s32.totalorder %s27, 0
      %p138 = por %p136, %p137
      %s140 = sadd.s32 %s139, 1
      %p143 = scmp.eq.s32.totalorder %s21, 1
      %p144 = scmp.ne.s32.totalorder %s139, %s141
      %p145 = scmp.eq.s32.totalorder %s21, 0
      %p146 = por %p144, %p145
      %p147 = scmp.ne.s32.totalorder %s139, %s141
      %p148 = scmp.eq.s32.totalorder %s26, 1
      %p149 = por %p147, %p148
      %p150 = scmp.ne.s32.totalorder %s141, %s142
      %p151 = scmp.eq.s32.totalorder %s26, 0
      %p152 = por %p150, %p151
      %p153 = scmp.ne.s32.totalorder %s141, %s142
      %p154 = scmp.eq.s32.totalorder %s27, 1
      %p155 = por %p153, %p154
      %p157 = scmp.ne.s32.totalorder %s142, %s156
      %p158 = scmp.eq.s32.totalorder %s27, 0
      %p159 = por %p157, %p158
      %s161 = sadd.s32 %s160, 1
      %p164 = scmp.eq.s32.totalorder %s21, 1
      %p165 = scmp.ne.s32.totalorder %s160, %s162
      %p166 = scmp.eq.s32.totalorder %s21, 0
      %p167 = por %p165, %p166
      %p168 = scmp.ne.s32.totalorder %s160, %s162
      %p169 = scmp.eq.s32.totalorder %s26, 1
      %p170 = por %p168, %p169
      %p171 = scmp.ne.s32.totalorder %s162, %s163
      %p172 = scmp.eq.s32.totalorder %s26, 0
      %p173 = por %p171, %p172
      %p174 = scmp.ne.s32.totalorder %s162, %s163
      %p175 = scmp.eq.s32.totalorder %s27, 1
      %p176 = por %p174, %p175
      %p178 = scmp.ne.s32.totalorder %s163, %s177
      %p179 = scmp.eq.s32.totalorder %s27, 0
      %p180 = por %p178, %p179
      %s182 = sadd.s32 %s181, 1
      %p185 = scmp.eq.s32.totalorder %s21, 1
      %p186 = scmp.ne.s32.totalorder %s181, %s183
      %p187 = scmp.eq.s32.totalorder %s21, 0
      %p188 = por %p186, %p187
      %p189 = scmp.ne.s32.totalorder %s181, %s183
      %p190 = scmp.eq.s32.totalorder %s26, 1
      %p191 = por %p189, %p190
      %p192 = scmp.ne.s32.totalorder %s183, %s184
      %p193 = scmp.eq.s32.totalorder %s26, 0
      %p194 = por %p192, %p193
      %p195 = scmp.ne.s32.totalorder %s183, %s184
      %p196 = scmp.eq.s32.totalorder %s27, 1
      %p197 = por %p195, %p196
      %p199 = scmp.ne.s32.totalorder %s184, %s198
      %p200 = scmp.eq.s32.totalorder %s27, 0
      %p201 = por %p199, %p200
      %s203 = sadd.s32 %s202, 1
      %p206 = scmp.eq.s32.totalorder %s21, 1
      %p207 = scmp.ne.s32.totalorder %s202, %s204
      %p208 = scmp.eq.s32.totalorder %s21, 0
      %p209 = por %p207, %p208
      %p210 = scmp.ne.s32.totalorder %s202, %s204
      %p211 = scmp.eq.s32.totalorder %s26, 1
      %p212 = por %p210, %p211
      %p213 = scmp.ne.s32.totalorder %s204, %s205
      %p214 = scmp.eq.s32.totalorder %s26, 0
      %p215 = por %p213, %p214
      %p216 = scmp.ne.s32.totalorder %s204, %s205
      %p217 = scmp.eq.s32.totalorder %s27, 1
      %p218 = por %p216, %p217
      %p220 = scmp.ne.s32.totalorder %s205, %s219
      %p221 = scmp.eq.s32.totalorder %s27, 0
      %p222 = por %p220, %p221
      %s224 = sadd.s32 %s223, 1
      %p227 = scmp.eq.s32.totalorder %s21, 1
      %p228 = scmp.ne.s32.totalorder %s223, %s225
      %p229 = scmp.eq.s32.totalorder %s21, 0
      %p230 = por %p228, %p229
      %p231 = scmp.ne.s32.totalorder %s223, %s225
      %p232 = scmp.eq.s32.totalorder %s26, 1
      %p233 = por %p231, %p232
      %p234 = scmp.ne.s32.totalorder %s225, %s226
      %p235 = scmp.eq.s32.totalorder %s26, 0
      %p236 = por %p234, %p235
      %p237 = scmp.ne.s32.totalorder %s225, %s226
      %p238 = scmp.eq.s32.totalorder %s27, 1
      %p239 = por %p237, %p238
      %p241 = scmp.ne.s32.totalorder %s226, %s240
      %p242 = scmp.eq.s32.totalorder %s27, 0
      %p243 = por %p241, %p242
      %s245 = sadd.s32 %s244, 1
      %p248 = scmp.eq.s32.totalorder %s21, 1
      %p249 = scmp.ne.s32.totalorder %s244, %s246
      %p250 = scmp.eq.s32.totalorder %s21, 0
      %p251 = por %p249, %p250
      %p252 = scmp.ne.s32.totalorder %s244, %s246
      %p253 = scmp.eq.s32.totalorder %s26, 1
      %p254 = por %p252, %p253
      %p255 = scmp.ne.s32.totalorder %s246, %s247
      %p256 = scmp.eq.s32.totalorder %s26, 0
      %p257 = por %p255, %p256
      %p258 = scmp.ne.s32.totalorder %s246, %s247
      %p259 = scmp.eq.s32.totalorder %s27, 1
      %p260 = por %p258, %p259
      %p262 = scmp.ne.s32.totalorder %s247, %s261
      %p263 = scmp.eq.s32.totalorder %s27, 0
      %p264 = por %p262, %p263
      %s265 = ssub.s32 %s21, %s28
      %p266 = scmp.eq.s32.totalorder %s265, 0
      %s268 = sadd.s32 %s267, 1
      %s269 = scalar_select %p266, %s267, %s268
      %p272 = pneg %p266
      %p273 = scmp.eq.s32.totalorder %s21, 1
      %p274 = por %p272, %p273
      %p275 = scmp.ne.s32.totalorder %s267, %s270
      %p276 = scmp.eq.s32.totalorder %s21, 0
      %p277 = por %p275, %p276
      %p278 = scmp.ne.s32.totalorder %s267, %s270
      %p279 = scmp.eq.s32.totalorder %s26, 1
      %p280 = por %p278, %p279
      %p281 = scmp.ne.s32.totalorder %s270, %s271
      %p282 = scmp.eq.s32.totalorder %s26, 0
      %p283 = por %p281, %p282
      %p284 = scmp.ne.s32.totalorder %s270, %s271
      %p285 = scmp.eq.s32.totalorder %s27, 1
      %p286 = por %p284, %p285
      %p288 = scmp.ne.s32.totalorder %s271, %s287
      %p289 = scmp.eq.s32.totalorder %s27, 0
      %p290 = por %p288, %p289
      %p291 = scmp.le.s32.totalorder 1, %s21
      %p292 = scmp.lt.s32.totalorder %s21, 3
      %p293 = pnand %p291, %p292
      %p294 = pneg %p293
      // Predicated region
      $region9: #{tpu_custom_call.1} parent=5 // pred_check
        _
      $region10: #{tpu_custom_call.1} parent=5 // pred_check_branch
        %296 = sbr.rel (%p293) target = $region12
      $region11: #{tpu_custom_call.1} parent=5 // pred_region
        %s297 = ssub.s32 %s21, 1
        // Predicated region
        $region13: #{tpu_custom_call.1} parent=11 // pred_check
          %p298 = pneg %p68
        $region14: #{tpu_custom_call.1} parent=11 // pred_check_branch
          %300 = sbr.rel (%p298) target = $region16
        $region15: #{tpu_custom_call.1} parent=11 // pred_region
          _
        $region16: #{tpu_custom_call.1} parent=11 // pred_fallthru
          _
        // Predicated region
        $region17: #{tpu_custom_call.1} parent=11 // pred_check
          %p301 = pneg %p89
        $region18: #{tpu_custom_call.1} parent=11 // pred_check_branch
          %303 = sbr.rel (%p301) target = $region20
        $region19: #{tpu_custom_call.1} parent=11 // pred_region
          %s305 = ssub.s32 16, 16
          %306 = vsyncadd [#allocation4], %s305
          %s308 = sshll.u32 [#allocation3], 4
          %s309 = int_to_ptr.vmem [resolvable:$true] %s308
          %311 = dma.hbm_to_vmem [thread:$0]  %s2, 16, %s309, [#allocation4]
        $region20: #{tpu_custom_call.1} parent=11 // pred_fallthru
          _
        // Predicated region
        $region21: #{tpu_custom_call.1} parent=11 // pred_check
          %p312 = pneg %p110
        $region22: #{tpu_custom_call.1} parent=11 // pred_check_branch
          %314 = sbr.rel (%p312) target = $region24
        $region23: #{tpu_custom_call.1} parent=11 // pred_region
          %s316 = ssub.s32 256, 256
          %317 = vsyncadd [#allocation6], %s316
          %s318 = sshll.u32 [#allocation5], 4
          %s319 = int_to_ptr.vmem [resolvable:$true] %s318
          %324 = dma.hbm_to_vmem [thread:$0]  %s3, 256, %s319, [#allocation6], 64, 64, 4
        $region24: #{tpu_custom_call.1} parent=11 // pred_fallthru
          _
        // Predicated region
        $region25: #{tpu_custom_call.1} parent=11 // pred_check
          %p325 = pneg %p131
        $region26: #{tpu_custom_call.1} parent=11 // pred_check_branch
          %327 = sbr.rel (%p325) target = $region28
        $region27: #{tpu_custom_call.1} parent=11 // pred_region
          %s329 = ssub.s32 16, 16
          %330 = vsyncadd [#allocation6], %s329
          %s332 = sshll.u32 [#allocation7], 4
          %s333 = int_to_ptr.vmem [resolvable:$true] %s332
          %335 = dma.hbm_to_vmem [thread:$0]  %s4, 16, %s333, [#allocation6]
        $region28: #{tpu_custom_call.1} parent=11 // pred_fallthru
          _
        // Predicated region
        $region29: #{tpu_custom_call.1} parent=11 // pred_check
          %p336 = pneg %p152
        $region30: #{tpu_custom_call.1} parent=11 // pred_check_branch
          %338 = sbr.rel (%p336) target = $region32
        $region31: #{tpu_custom_call.1} parent=11 // pred_region
          _
        $region32: #{tpu_custom_call.1} parent=11 // pred_fallthru
          _
        // Predicated region
        $region33: #{tpu_custom_call.1} parent=11 // pred_check
          %p339 = pneg %p173
        $region34: #{tpu_custom_call.1} parent=11 // pred_check_branch
          %341 = sbr.rel (%p339) target = $region36
        $region35: #{tpu_custom_call.1} parent=11 // pred_region
          _
        $region36: #{tpu_custom_call.1} parent=11 // pred_fallthru
          _
        // Predicated region
        $region37: #{tpu_custom_call.1} parent=11 // pred_check
          %p342 = pneg %p194
        $region38: #{tpu_custom_call.1} parent=11 // pred_check_branch
          %344 = sbr.rel (%p342) target = $region40
        $region39: #{tpu_custom_call.1} parent=11 // pred_region
          %s346 = ssub.s32 256, 256
          %347 = vsyncadd [#allocation9], %s346
          %s348 = sshll.u32 [#allocation8], 4
          %s349 = int_to_ptr.vmem [resolvable:$true] %s348
          %354 = dma.hbm_to_vmem [thread:$0]  %s7, 256, %s349, [#allocation9], 128, 128, 8
        $region40: #{tpu_custom_call.1} parent=11 // pred_fallthru
          _
        // Predicated region
        $region41: #{tpu_custom_call.1} parent=11 // pred_check
          %p355 = pneg %p215
        $region42: #{tpu_custom_call.1} parent=11 // pred_check_branch
          %357 = sbr.rel (%p355) target = $region44
        $region43: #{tpu_custom_call.1} parent=11 // pred_region
          _
        $region44: #{tpu_custom_call.1} parent=11 // pred_fallthru
          _
        // Predicated region
        $region45: #{tpu_custom_call.1} parent=11 // pred_check
          %p358 = pneg %p236
        $region46: #{tpu_custom_call.1} parent=11 // pred_check_branch
          %360 = sbr.rel (%p358) target = $region48
        $region47: #{tpu_custom_call.1} parent=11 // pred_region
          %s362 = ssub.s32 640, 640
          %363 = vsyncadd [#allocation9], %s362
          %s364 = sshll.u32 [#allocation10], 4
          %s365 = int_to_ptr.vmem [resolvable:$true] %s364
          %370 = dma.hbm_to_vmem [thread:$0]  %s9, 640, %s365, [#allocation9], 320, 320, 20
        $region48: #{tpu_custom_call.1} parent=11 // pred_fallthru
          _
        // Predicated region
        $region49: #{tpu_custom_call.1} parent=11 // pred_check
          %p371 = pneg %p257
        $region50: #{tpu_custom_call.1} parent=11 // pred_check_branch
          %373 = sbr.rel (%p371) target = $region52
        $region51: #{tpu_custom_call.1} parent=11 // pred_region
          _
        $region52: #{tpu_custom_call.1} parent=11 // pred_fallthru
          _
      $region12: #{tpu_custom_call.1} parent=5 // pred_fallthru
        _
      %p374 = scmp.lt.s32.totalorder %s21, 2
      // Predicated region
      $region53: #{tpu_custom_call.1} parent=5 // pred_check
        %p375 = pneg %p374
      $region54: #{tpu_custom_call.1} parent=5 // pred_check_branch
        %377 = sbr.rel (%p375) target = $region56
      $region55: #{tpu_custom_call.1} parent=5 // pred_region
        // Predicated region
        $region57: #{tpu_custom_call.1} parent=55 // pred_check
          %p378 = pneg %p41
        $region58: #{tpu_custom_call.1} parent=55 // pred_check_branch
          %380 = sbr.rel (%p378) target = $region60
        $region59: #{tpu_custom_call.1} parent=55 // pred_region
          %p381 = scmp.lt.s32.totalorder %s21, 1
          %s382 = scalar_select %p381, %s21, 1
          %s383 = smul.addr %s382, 18
          %s384 = smul.addr %s383, 4
          %s385 = scalar_lea.vmem %s0, %s384
        $region60: #{tpu_custom_call.1} parent=55 // pred_fallthru
          _
      $region56: #{tpu_custom_call.1} parent=5 // pred_fallthru
        _
      %p386 = scmp.le.s32.totalorder 1, %s21
      %p387 = scmp.lt.s32.totalorder %s21, 3
      %p388 = pnand %p386, %p387
      %p389 = pneg %p388
      // Predicated region
      $region61: #{tpu_custom_call.1} parent=5 // pred_check
        _
      $region62: #{tpu_custom_call.1} parent=5 // pred_check_branch
        %391 = sbr.rel (%p388) target = $region64
      $region63: #{tpu_custom_call.1} parent=5 // pred_region
        %s392 = ssub.s32 %s21, 1
        // Predicated region
        $region65: #{tpu_custom_call.1} parent=63 // pred_check
          %p393 = pneg %p89
        $region66: #{tpu_custom_call.1} parent=63 // pred_check_branch
          %395 = sbr.rel (%p393) target = $region68
        $region67: #{tpu_custom_call.1} parent=63 // pred_region
          %396 = dma.done [#allocation4], 16
        $region68: #{tpu_custom_call.1} parent=63 // pred_fallthru
          _
        // Predicated region
        $region69: #{tpu_custom_call.1} parent=63 // pred_check
          %p397 = pneg %p110
        $region70: #{tpu_custom_call.1} parent=63 // pred_check_branch
          %399 = sbr.rel (%p397) target = $region72
        $region71: #{tpu_custom_call.1} parent=63 // pred_region
          %400 = dma.done [#allocation6], 256
        $region72: #{tpu_custom_call.1} parent=63 // pred_fallthru
          _
        // Predicated region
        $region73: #{tpu_custom_call.1} parent=63 // pred_check
          %p401 = pneg %p131
        $region74: #{tpu_custom_call.1} parent=63 // pred_check_branch
          %403 = sbr.rel (%p401) target = $region76
        $region75: #{tpu_custom_call.1} parent=63 // pred_region
          %404 = dma.done [#allocation6], 16
        $region76: #{tpu_custom_call.1} parent=63 // pred_fallthru
          _
        // Predicated region
        $region77: #{tpu_custom_call.1} parent=63 // pred_check
          %p405 = pneg %p194
        $region78: #{tpu_custom_call.1} parent=63 // pred_check_branch
          %407 = sbr.rel (%p405) target = $region80
        $region79: #{tpu_custom_call.1} parent=63 // pred_region
          %408 = dma.done [#allocation9], 256
        $region80: #{tpu_custom_call.1} parent=63 // pred_fallthru
          _
        // Predicated region
        $region81: #{tpu_custom_call.1} parent=63 // pred_check
          %p409 = pneg %p236
        $region82: #{tpu_custom_call.1} parent=63 // pred_check_branch
          %411 = sbr.rel (%p409) target = $region84
        $region83: #{tpu_custom_call.1} parent=63 // pred_region
          %412 = dma.done [#allocation9], 640
        $region84: #{tpu_custom_call.1} parent=63 // pred_fallthru
          _
        %p413 = scmp.lt.s32.totalorder %s26, 1
        %s414 = scalar_select %p413, %s26, 1
        %s415 = smul.addr %s414, 18
        %s416 = smul.addr %s415, 4
        %s417 = scalar_lea.vmem %s0, %s416
        %p418 = pneg %p47
        %p419 = pneg %p44
        %p420 = pneg %p68
        %p421 = pneg %p65
        %p422 = pneg %p89
        %p423 = pneg %p86
        %p424 = pneg %p110
        %p425 = pneg %p107
        %p426 = pneg %p131
        %p427 = pneg %p128
        %p428 = pneg %p152
        %p429 = pneg %p149
        %p430 = pneg %p173
        %p431 = pneg %p170
        %p432 = pneg %p194
        %p433 = pneg %p191
        %p434 = pneg %p215
        %p435 = pneg %p212
        %p436 = pneg %p236
        %p437 = pneg %p233
        %p438 = pneg %p257
        %p439 = pneg %p254
        %p440 = pneg %p283
        %p441 = pneg %p280
        %p442 = scmp.lt.s32.totalorder %s26, 1
        %s443 = scalar_select %p442, %s26, 1
        %s444 = smul.addr %s443, 270
        %s445 = smul.addr %s444, 8
        %s446 = scalar_lea.vmem %s11, %s445
        %p447 = scmp.lt.s32.totalorder %s26, 1
        %s448 = scalar_select %p447, %s26, 1
        %s449 = smul.addr %s448, 18
        %s450 = smul.addr %s449, 4
        %s451 = scalar_lea.vmem %s0, %s450
        %p452 = scmp.lt.s32.totalorder %s26, 1
        %s453 = scalar_select %p452, %s26, 1
        %s454 = smul.addr %s453, 270
        %s455 = smul.addr %s454, 8
        %s456 = scalar_lea.vmem %s11, %s455
        %v458 = vld [vmem:[%s451] sm:$0xf]
        %v459 = vld [vmem:[%s451 + $0x4] sm:$0xf]
        %v460 = vld [vmem:[%s451 + $0x8] sm:$0xf]
        %v461 = vld [vmem:[%s451 + $0xc] sm:$0xf]
        %v462 = vld [vmem:[%s451 + $0x10] sm:$0xf]
        %v463 = vld [vmem:[%s451 + $0x14] sm:$0xf]
        %v464 = vld [vmem:[%s451 + $0x18] sm:$0xf]
        %v465 = vld [vmem:[%s451 + $0x1c] sm:$0xf]
        %v466 = vld [vmem:[%s451 + $0x20] sm:$0xf]
        %v467 = vld [vmem:[%s451 + $0x24] sm:$0xf]
        %v468 = vld [vmem:[%s451 + $0x28] sm:$0xf]
        %v469 = vld [vmem:[%s451 + $0x2c] sm:$0xf]
        %v470 = vld [vmem:[%s451 + $0x30] sm:$0xf]
        %v471 = vld [vmem:[%s451 + $0x34] sm:$0xf]
        %v472 = vld [vmem:[%s451 + $0x38] sm:$0xf]
        %v473 = vld [vmem:[%s451 + $0x3c] sm:$0xf]
        %v474 = vld [vmem:[%s451 + $0x40] sm:$0xf]
        %v475 = vld [vmem:[%s451 + $0x44] sm:$0xf]
        %v476 = vld [vmem:[%s1] sm:$0xf]
        %v477 = vld [vmem:[%s1 + $0x4] sm:$0xf]
        %v478 = vld [vmem:[%s1 + $0x8] sm:$0xf]
        %v479 = vld [vmem:[%s1 + $0xc] sm:$0xf]
        %v480 = vld [vmem:[%s1 + $0x10] sm:$0xf]
        %v481 = vld [vmem:[%s1 + $0x14] sm:$0xf]
        %v482 = vld [vmem:[#allocation3] sm:$0x1]
        %v484 = vlaneseq
        %v485 = vshrl.u32 %v484, 7
        %v486 = vsub.s32 0, %v485
        %v487 = vrot.slane %v482, %v486
        %v507 = vunpack.c.l.b16 %v458
        %v508 = vunpack.c.l.b16 %v459
        %v509 = vunpack.c.l.b16 %v460
        %v510 = vunpack.c.l.b16 %v461
        %v511 = vunpack.c.l.b16 %v462
        %v512 = vunpack.c.l.b16 %v463
        %v513 = vunpack.c.l.b16 %v464
        %v514 = vunpack.c.l.b16 %v465
        %v515 = vunpack.c.l.b16 %v466
        %v516 = vunpack.c.l.b16 %v467
        %v517 = vunpack.c.l.b16 %v468
        %v518 = vunpack.c.l.b16 %v469
        %v519 = vunpack.c.l.b16 %v470
        %v520 = vunpack.c.l.b16 %v471
        %v521 = vunpack.c.l.b16 %v472
        %v522 = vunpack.c.l.b16 %v473
        %v523 = vunpack.c.l.b16 %v474
        %v524 = vunpack.c.l.b16 %v475
        %v525 = vpack.c.b16 %v508, %v507
        %v526 = vpack.c.b16 %v510, %v509
        %v527 = vpack.c.b16 %v512, %v511
        %v528 = vpack.c.b16 %v514, %v513
        %v529 = vpack.c.b16 %v516, %v515
        %v530 = vpack.c.b16 %v518, %v517
        %v531 = vpack.c.b16 %v520, %v519
        %v532 = vpack.c.b16 %v522, %v521
        %v533 = vpack.c.b16 %v524, %v523
        %v540 = vunpack.c.l.b16 %v476
        %v541 = vunpack.c.l.b16 %v477
        %v542 = vunpack.c.l.b16 %v478
        %v543 = vunpack.c.l.b16 %v479
        %v544 = vunpack.c.l.b16 %v480
        %v545 = vunpack.c.l.b16 %v481
        %v546 = vpack.c.b16 %v541, %v540
        %v547 = vpack.c.b16 %v543, %v542
        %v548 = vpack.c.b16 %v545, %v544
        %vm552 = vcmask 392192
        %v554 = vsel %vm552, %v525, 0
        %v557 = vsel %vm552, %v526, 0
        %v560 = vsel %vm552, %v527, 0
        %v563 = vsel %vm552, %v528, 0
        %v566 = vsel %vm552, %v529, 0
        %v569 = vsel %vm552, %v530, 0
        %v572 = vsel %vm552, %v531, 0
        %v575 = vsel %vm552, %v532, 0
        %v578 = vsel %vm552, %v533, 0
        %580 = vmatprep.subr.bf16.mxu0 0
        %581 = vmatpush1.bf16.msra.mxu0 0
        %582 = vmatprep.subr.bf16.mxu0 0
        %583 = vmatpush1.bf16.msra.mxu0 0
        %584 = vmatprep.subr.bf16.mxu0 0
        %585 = vmatpush1.bf16.msra.mxu0 0
        %586 = vmatprep.subr.bf16.mxu0 0
        %587 = vmatpush1.bf16.msra.mxu0 0
        %588 = vmatprep.subr.bf16.mxu0 0
        %589 = vmatpush1.bf16.msra.mxu0 0
        %590 = vmatprep.subr.bf16.mxu0 0
        %591 = vmatpush1.bf16.msra.mxu0 %v548
        %592 = vmatprep.subr.bf16.mxu0 0
        %593 = vmatpush1.bf16.msra.mxu0 %v547
        %594 = vmatprep.subr.bf16.mxu0 0
        %595 = vmatpush1.bf16.msra.mxu0 %v546
        %596 = vmatprep.subr.bf16.mxu0 0
        %597 = vmatpush2.bf16.msra.mxu0 0
        %598 = vmatprep.subr.bf16.mxu0 0
        %599 = vmatpush2.bf16.msra.mxu0 0
        %600 = vmatprep.subr.bf16.mxu0 0
        %601 = vmatpush2.bf16.msra.mxu0 0
        %602 = vmatprep.subr.bf16.mxu0 0
        %603 = vmatpush2.bf16.msra.mxu0 0
        %604 = vmatprep.subr.bf16.mxu0 0
        %605 = vmatpush2.bf16.msra.mxu0 0
        %606 = vmatprep.subr.bf16.mxu0 0
        %607 = vmatpush2.bf16.msra.mxu0 0
        %608 = vmatprep.subr.bf16.mxu0 0
        %609 = vmatpush2.bf16.msra.mxu0 0
        %610 = vmatprep.subr.bf16.mxu0 0
        %611 = vmatpush2.bf16.msra.mxu0 0
        %612 = vmatprep.mubr.bf16.mxu0 0
        %613 = vmatmul.mubr.bf16.gmra.mxu0 %v554
        %v614 = vpop.f32.mrf.mxu0
        %v615 = vadd.f32 %v487, %v614
        %v616 = vpop.f32.mrf.mxu0
        %v617 = vpop.f32.mrf.mxu0
        %v618 = vadd.f32 %v487, %v617
        %v619 = vpop.f32.mrf.mxu0
        %620 = vmatprep.mubr.bf16.mxu0 0
        %621 = vmatmul.mubr.bf16.gmra.mxu0 %v557
        %v622 = vpop.f32.mrf.mxu0
        %v623 = vadd.f32 %v487, %v622
        %v624 = vpop.f32.mrf.mxu0
        %v625 = vpop.f32.mrf.mxu0
        %v626 = vadd.f32 %v487, %v625
        %v627 = vpop.f32.mrf.mxu0
        %628 = vmatprep.mubr.bf16.mxu0 0
        %629 = vmatmul.mubr.bf16.gmra.mxu0 %v560
        %v630 = vpop.f32.mrf.mxu0
        %v631 = vadd.f32 %v487, %v630
        %v632 = vpop.f32.mrf.mxu0
        %v633 = vpop.f32.mrf.mxu0
        %v634 = vadd.f32 %v487, %v633
        %v635 = vpop.f32.mrf.mxu0
        %636 = vmatprep.mubr.bf16.mxu0 0
        %637 = vmatmul.mubr.bf16.gmra.mxu0 %v563
        %v638 = vpop.f32.mrf.mxu0
        %v639 = vadd.f32 %v487, %v638
        %v640 = vpop.f32.mrf.mxu0
        %v641 = vpop.f32.mrf.mxu0
        %v642 = vadd.f32 %v487, %v641
        %v643 = vpop.f32.mrf.mxu0
        %644 = vmatprep.mubr.bf16.mxu0 0
        %645 = vmatmul.mubr.bf16.gmra.mxu0 %v566
        %v646 = vpop.f32.mrf.mxu0
        %v647 = vadd.f32 %v487, %v646
        %v648 = vpop.f32.mrf.mxu0
        %v649 = vpop.f32.mrf.mxu0
        %v650 = vadd.f32 %v487, %v649
        %v651 = vpop.f32.mrf.mxu0
        %652 = vmatprep.mubr.bf16.mxu0 0
        %653 = vmatmul.mubr.bf16.gmra.mxu0 %v569
        %v654 = vpop.f32.mrf.mxu0
        %v655 = vadd.f32 %v487, %v654
        %v656 = vpop.f32.mrf.mxu0
        %v657 = vpop.f32.mrf.mxu0
        %v658 = vadd.f32 %v487, %v657
        %v659 = vpop.f32.mrf.mxu0
        %660 = vmatprep.mubr.bf16.mxu0 0
        %661 = vmatmul.mubr.bf16.gmra.mxu0 %v572
        %v662 = vpop.f32.mrf.mxu0
        %v663 = vadd.f32 %v487, %v662
        %v664 = vpop.f32.mrf.mxu0
        %v665 = vpop.f32.mrf.mxu0
        %v666 = vadd.f32 %v487, %v665
        %v667 = vpop.f32.mrf.mxu0
        %668 = vmatprep.mubr.bf16.mxu0 0
        %669 = vmatmul.mubr.bf16.gmra.mxu0 %v575
        %v670 = vpop.f32.mrf.mxu0
        %v671 = vadd.f32 %v487, %v670
        %v672 = vpop.f32.mrf.mxu0
        %v673 = vpop.f32.mrf.mxu0
        %v674 = vadd.f32 %v487, %v673
        %v675 = vpop.f32.mrf.mxu0
        %676 = vmatprep.mubr.bf16.mxu0 0
        %677 = vmatmul.mubr.bf16.gmra.mxu0 %v578
        %v678 = vpop.f32.mrf.mxu0
        %v679 = vadd.f32 %v487, %v678
        %v680 = vpop.f32.mrf.mxu0
        %v681 = vpop.f32.mrf.mxu0
        %v682 = vadd.f32 %v487, %v681
        %v683 = vpop.f32.mrf.mxu0
        %684 = vdwg.mxu0
        %v685 = vmax.f32 %v615, 0.0
        %v686 = vmax.f32 %v618, 0.0
        %v687 = vmax.f32 %v623, 0.0
        %v688 = vmax.f32 %v626, 0.0
        %v689 = vmax.f32 %v631, 0.0
        %v690 = vmax.f32 %v634, 0.0
        %v691 = vmax.f32 %v639, 0.0
        %v692 = vmax.f32 %v642, 0.0
        %v693 = vmax.f32 %v647, 0.0
        %v694 = vmax.f32 %v650, 0.0
        %v695 = vmax.f32 %v655, 0.0
        %v696 = vmax.f32 %v658, 0.0
        %v697 = vmax.f32 %v663, 0.0
        %v698 = vmax.f32 %v666, 0.0
        %v699 = vmax.f32 %v671, 0.0
        %v700 = vmax.f32 %v674, 0.0
        %v701 = vmax.f32 %v679, 0.0
        %v702 = vmax.f32 %v682, 0.0
        %v703 = vpack.c.bf16 %v686, %v685
        %v704 = vpack.c.bf16 %v688, %v687
        %v705 = vpack.c.bf16 %v690, %v689
        %v706 = vpack.c.bf16 %v692, %v691
        %v707 = vpack.c.bf16 %v694, %v693
        %v708 = vpack.c.bf16 %v696, %v695
        %v709 = vpack.c.bf16 %v698, %v697
        %v710 = vpack.c.bf16 %v700, %v699
        %v711 = vpack.c.bf16 %v702, %v701
        %v712 = vld [vmem:[#allocation5] sm:$0xf]
        %v713 = vld [vmem:[#allocation5 + $0x4] sm:$0xf]
        %v714 = vld [vmem:[#allocation5 + $0x8] sm:$0xf]
        %v715 = vld [vmem:[#allocation5 + $0xc] sm:$0xf]
        %v716 = vld [vmem:[#allocation7] sm:$0x1]
        %v718 = vlaneseq
        %v719 = vshrl.u32 %v718, 7
        %v720 = vsub.s32 0, %v719
        %v721 = vrot.slane %v716, %v720
        %v727 = vunpack.c.l.b16 %v712
        %v728 = vunpack.c.l.b16 %v713
        %v729 = vunpack.c.l.b16 %v714
        %v730 = vunpack.c.l.b16 %v715
        %v731 = vpack.c.b16 %v728, %v727
        %v732 = vpack.c.b16 %v730, %v729
        %vm735 = vcmask 261120
        %v737 = vsel %vm735, %v703, 0
        %v740 = vsel %vm735, %v704, 0
        %v743 = vsel %vm735, %v705, 0
        %v746 = vsel %vm735, %v706, 0
        %v749 = vsel %vm735, %v707, 0
        %v752 = vsel %vm735, %v708, 0
        %v755 = vsel %vm735, %v709, 0
        %v758 = vsel %vm735, %v710, 0
        %v761 = vsel %vm735, %v711, 0
        %763 = vmatprep.subr.bf16.mxu0 0
        %764 = vmatpush1.bf16.msra.mxu0 0
        %765 = vmatprep.subr.bf16.mxu0 0
        %766 = vmatpush1.bf16.msra.mxu0 0
        %767 = vmatprep.subr.bf16.mxu0 0
        %768 = vmatpush1.bf16.msra.mxu0 0
        %769 = vmatprep.subr.bf16.mxu0 0
        %770 = vmatpush1.bf16.msra.mxu0 0
        %771 = vmatprep.subr.bf16.mxu0 0
        %772 = vmatpush1.bf16.msra.mxu0 0
        %773 = vmatprep.subr.bf16.mxu0 0
        %774 = vmatpush1.bf16.msra.mxu0 0
        %775 = vmatprep.subr.bf16.mxu0 0
        %776 = vmatpush1.bf16.msra.mxu0 %v732
        %777 = vmatprep.subr.bf16.mxu0 0
        %778 = vmatpush1.bf16.msra.mxu0 %v731
        %779 = vmatprep.subr.bf16.mxu0 0
        %780 = vmatpush2.bf16.msra.mxu0 0
        %781 = vmatprep.subr.bf16.mxu0 0
        %782 = vmatpush2.bf16.msra.mxu0 0
        %783 = vmatprep.subr.bf16.mxu0 0
        %784 = vmatpush2.bf16.msra.mxu0 0
        %785 = vmatprep.subr.bf16.mxu0 0
        %786 = vmatpush2.bf16.msra.mxu0 0
        %787 = vmatprep.subr.bf16.mxu0 0
        %788 = vmatpush2.bf16.msra.mxu0 0
        %789 = vmatprep.subr.bf16.mxu0 0
        %790 = vmatpush2.bf16.msra.mxu0 0
        %791 = vmatprep.subr.bf16.mxu0 0
        %792 = vmatpush2.bf16.msra.mxu0 0
        %793 = vmatprep.subr.bf16.mxu0 0
        %794 = vmatpush2.bf16.msra.mxu0 0
        %795 = vmatprep.mubr.bf16.mxu0 0
        %796 = vmatmul.mubr.bf16.gmra.mxu0 %v737
        %v797 = vpop.f32.mrf.mxu0
        %v798 = vadd.f32 %v721, %v797
        %v799 = vpop.f32.mrf.mxu0
        %v800 = vpop.f32.mrf.mxu0
        %v801 = vadd.f32 %v721, %v800
        %v802 = vpop.f32.mrf.mxu0
        %803 = vmatprep.mubr.bf16.mxu0 0
        %804 = vmatmul.mubr.bf16.gmra.mxu0 %v740
        %v805 = vpop.f32.mrf.mxu0
        %v806 = vadd.f32 %v721, %v805
        %v807 = vpop.f32.mrf.mxu0
        %v808 = vpop.f32.mrf.mxu0
        %v809 = vadd.f32 %v721, %v808
        %v810 = vpop.f32.mrf.mxu0
        %811 = vmatprep.mubr.bf16.mxu0 0
        %812 = vmatmul.mubr.bf16.gmra.mxu0 %v743
        %v813 = vpop.f32.mrf.mxu0
        %v814 = vadd.f32 %v721, %v813
        %v815 = vpop.f32.mrf.mxu0
        %v816 = vpop.f32.mrf.mxu0
        %v817 = vadd.f32 %v721, %v816
        %v818 = vpop.f32.mrf.mxu0
        %819 = vmatprep.mubr.bf16.mxu0 0
        %820 = vmatmul.mubr.bf16.gmra.mxu0 %v746
        %v821 = vpop.f32.mrf.mxu0
        %v822 = vadd.f32 %v721, %v821
        %v823 = vpop.f32.mrf.mxu0
        %v824 = vpop.f32.mrf.mxu0
        %v825 = vadd.f32 %v721, %v824
        %v826 = vpop.f32.mrf.mxu0
        %827 = vmatprep.mubr.bf16.mxu0 0
        %828 = vmatmul.mubr.bf16.gmra.mxu0 %v749
        %v829 = vpop.f32.mrf.mxu0
        %v830 = vadd.f32 %v721, %v829
        %v831 = vpop.f32.mrf.mxu0
        %v832 = vpop.f32.mrf.mxu0
        %v833 = vadd.f32 %v721, %v832
        %v834 = vpop.f32.mrf.mxu0
        %835 = vmatprep.mubr.bf16.mxu0 0
        %836 = vmatmul.mubr.bf16.gmra.mxu0 %v752
        %v837 = vpop.f32.mrf.mxu0
        %v838 = vadd.f32 %v721, %v837
        %v839 = vpop.f32.mrf.mxu0
        %v840 = vpop.f32.mrf.mxu0
        %v841 = vadd.f32 %v721, %v840
        %v842 = vpop.f32.mrf.mxu0
        %843 = vmatprep.mubr.bf16.mxu0 0
        %844 = vmatmul.mubr.bf16.gmra.mxu0 %v755
        %v845 = vpop.f32.mrf.mxu0
        %v846 = vadd.f32 %v721, %v845
        %v847 = vpop.f32.mrf.mxu0
        %v848 = vpop.f32.mrf.mxu0
        %v849 = vadd.f32 %v721, %v848
        %v850 = vpop.f32.mrf.mxu0
        %851 = vmatprep.mubr.bf16.mxu0 0
        %852 = vmatmul.mubr.bf16.gmra.mxu0 %v758
        %v853 = vpop.f32.mrf.mxu0
        %v854 = vadd.f32 %v721, %v853
        %v855 = vpop.f32.mrf.mxu0
        %v856 = vpop.f32.mrf.mxu0
        %v857 = vadd.f32 %v721, %v856
        %v858 = vpop.f32.mrf.mxu0
        %859 = vmatprep.mubr.bf16.mxu0 0
        %860 = vmatmul.mubr.bf16.gmra.mxu0 %v761
        %v861 = vpop.f32.mrf.mxu0
        %v862 = vadd.f32 %v721, %v861
        %v863 = vpop.f32.mrf.mxu0
        %v864 = vpop.f32.mrf.mxu0
        %v865 = vadd.f32 %v721, %v864
        %v866 = vpop.f32.mrf.mxu0
        %867 = vdwg.mxu0
        %v868 = vmax.f32 %v798, 0.0
        %v869 = vmax.f32 %v801, 0.0
        %v870 = vmax.f32 %v806, 0.0
        %v871 = vmax.f32 %v809, 0.0
        %v872 = vmax.f32 %v814, 0.0
        %v873 = vmax.f32 %v817, 0.0
        %v874 = vmax.f32 %v822, 0.0
        %v875 = vmax.f32 %v825, 0.0
        %v876 = vmax.f32 %v830, 0.0
        %v877 = vmax.f32 %v833, 0.0
        %v878 = vmax.f32 %v838, 0.0
        %v879 = vmax.f32 %v841, 0.0
        %v880 = vmax.f32 %v846, 0.0
        %v881 = vmax.f32 %v849, 0.0
        %v882 = vmax.f32 %v854, 0.0
        %v883 = vmax.f32 %v857, 0.0
        %v884 = vmax.f32 %v862, 0.0
        %v885 = vmax.f32 %v865, 0.0
        %v886 = vpack.c.bf16 %v869, %v868
        %v887 = vpack.c.bf16 %v871, %v870
        %v888 = vpack.c.bf16 %v873, %v872
        %v889 = vpack.c.bf16 %v875, %v874
        %v890 = vpack.c.bf16 %v877, %v876
        %v891 = vpack.c.bf16 %v879, %v878
        %v892 = vpack.c.bf16 %v881, %v880
        %v893 = vpack.c.bf16 %v883, %v882
        %v894 = vpack.c.bf16 %v885, %v884
        %v895 = vld [vmem:[%s5] sm:$0xf]
        %v896 = vld [vmem:[%s5 + $0x4] sm:$0xf]
        %v897 = vld [vmem:[%s5 + $0x8] sm:$0xf]
        %v898 = vld [vmem:[%s5 + $0xc] sm:$0xf]
        %v903 = vunpack.c.l.b16 %v895
        %v904 = vunpack.c.l.b16 %v896
        %v905 = vunpack.c.l.b16 %v897
        %v906 = vunpack.c.l.b16 %v898
        %v907 = vpack.c.b16 %v904, %v903
        %v908 = vpack.c.b16 %v906, %v905
        %v912 = vsel %vm735, %v886, 0
        %v915 = vsel %vm735, %v887, 0
        %v918 = vsel %vm735, %v888, 0
        %v921 = vsel %vm735, %v889, 0
        %v924 = vsel %vm735, %v890, 0
        %v927 = vsel %vm735, %v891, 0
        %v930 = vsel %vm735, %v892, 0
        %v933 = vsel %vm735, %v893, 0
        %v936 = vsel %vm735, %v894, 0
        %938 = vmatprep.subr.bf16.mxu0 0
        %939 = vmatpush1.bf16.msra.mxu0 0
        %940 = vmatprep.subr.bf16.mxu0 0
        %941 = vmatpush1.bf16.msra.mxu0 0
        %942 = vmatprep.subr.bf16.mxu0 0
        %943 = vmatpush1.bf16.msra.mxu0 0
        %944 = vmatprep.subr.bf16.mxu0 0
        %945 = vmatpush1.bf16.msra.mxu0 0
        %946 = vmatprep.subr.bf16.mxu0 0
        %947 = vmatpush1.bf16.msra.mxu0 0
        %948 = vmatprep.subr.bf16.mxu0 0
        %949 = vmatpush1.bf16.msra.mxu0 0
        %950 = vmatprep.subr.bf16.mxu0 0
        %951 = vmatpush1.bf16.msra.mxu0 %v908
        %952 = vmatprep.subr.bf16.mxu0 0
        %953 = vmatpush1.bf16.msra.mxu0 %v907
        %954 = vmatprep.subr.bf16.mxu0 0
        %955 = vmatpush2.bf16.msra.mxu0 0
        %956 = vmatprep.subr.bf16.mxu0 0
        %957 = vmatpush2.bf16.msra.mxu0 0
        %958 = vmatprep.subr.bf16.mxu0 0
        %959 = vmatpush2.bf16.msra.mxu0 0
        %960 = vmatprep.subr.bf16.mxu0 0
        %961 = vmatpush2.bf16.msra.mxu0 0
        %962 = vmatprep.subr.bf16.mxu0 0
        %963 = vmatpush2.bf16.msra.mxu0 0
        %964 = vmatprep.subr.bf16.mxu0 0
        %965 = vmatpush2.bf16.msra.mxu0 0
        %966 = vmatprep.subr.bf16.mxu0 0
        %967 = vmatpush2.bf16.msra.mxu0 0
        %968 = vmatprep.subr.bf16.mxu0 0
        %969 = vmatpush2.bf16.msra.mxu0 0
        %970 = vmatprep.mubr.bf16.mxu0 0
        %971 = vmatmul.mubr.bf16.gmra.mxu0 %v912
        %v972 = vpop.f32.mrf.mxu0
        %v973 = vadd.f32 0.0, %v972
        %v974 = vpop.f32.mrf.mxu0
        %v975 = vpop.f32.mrf.mxu0
        %v976 = vadd.f32 0.0, %v975
        %v977 = vpop.f32.mrf.mxu0
        %978 = vmatprep.mubr.bf16.mxu0 0
        %979 = vmatmul.mubr.bf16.gmra.mxu0 %v915
        %v980 = vpop.f32.mrf.mxu0
        %v981 = vadd.f32 0.0, %v980
        %v982 = vpop.f32.mrf.mxu0
        %v983 = vpop.f32.mrf.mxu0
        %v984 = vadd.f32 0.0, %v983
        %v985 = vpop.f32.mrf.mxu0
        %986 = vmatprep.mubr.bf16.mxu0 0
        %987 = vmatmul.mubr.bf16.gmra.mxu0 %v918
        %v988 = vpop.f32.mrf.mxu0
        %v989 = vadd.f32 0.0, %v988
        %v990 = vpop.f32.mrf.mxu0
        %v991 = vpop.f32.mrf.mxu0
        %v992 = vadd.f32 0.0, %v991
        %v993 = vpop.f32.mrf.mxu0
        %994 = vmatprep.mubr.bf16.mxu0 0
        %995 = vmatmul.mubr.bf16.gmra.mxu0 %v921
        %v996 = vpop.f32.mrf.mxu0
        %v997 = vadd.f32 0.0, %v996
        %v998 = vpop.f32.mrf.mxu0
        %v999 = vpop.f32.mrf.mxu0
        %v1000 = vadd.f32 0.0, %v999
        %v1001 = vpop.f32.mrf.mxu0
        %1002 = vmatprep.mubr.bf16.mxu0 0
        %1003 = vmatmul.mubr.bf16.gmra.mxu0 %v924
        %v1004 = vpop.f32.mrf.mxu0
        %v1005 = vadd.f32 0.0, %v1004
        %v1006 = vpop.f32.mrf.mxu0
        %v1007 = vpop.f32.mrf.mxu0
        %v1008 = vadd.f32 0.0, %v1007
        %v1009 = vpop.f32.mrf.mxu0
        %1010 = vmatprep.mubr.bf16.mxu0 0
        %1011 = vmatmul.mubr.bf16.gmra.mxu0 %v927
        %v1012 = vpop.f32.mrf.mxu0
        %v1013 = vadd.f32 0.0, %v1012
        %v1014 = vpop.f32.mrf.mxu0
        %v1015 = vpop.f32.mrf.mxu0
        %v1016 = vadd.f32 0.0, %v1015
        %v1017 = vpop.f32.mrf.mxu0
        %1018 = vmatprep.mubr.bf16.mxu0 0
        %1019 = vmatmul.mubr.bf16.gmra.mxu0 %v930
        %v1020 = vpop.f32.mrf.mxu0
        %v1021 = vadd.f32 0.0, %v1020
        %v1022 = vpop.f32.mrf.mxu0
        %v1023 = vpop.f32.mrf.mxu0
        %v1024 = vadd.f32 0.0, %v1023
        %v1025 = vpop.f32.mrf.mxu0
        %1026 = vmatprep.mubr.bf16.mxu0 0
        %1027 = vmatmul.mubr.bf16.gmra.mxu0 %v933
        %v1028 = vpop.f32.mrf.mxu0
        %v1029 = vadd.f32 0.0, %v1028
        %v1030 = vpop.f32.mrf.mxu0
        %v1031 = vpop.f32.mrf.mxu0
        %v1032 = vadd.f32 0.0, %v1031
        %v1033 = vpop.f32.mrf.mxu0
        %1034 = vmatprep.mubr.bf16.mxu0 0
        %1035 = vmatmul.mubr.bf16.gmra.mxu0 %v936
        %v1036 = vpop.f32.mrf.mxu0
        %v1037 = vadd.f32 0.0, %v1036
        %v1038 = vpop.f32.mrf.mxu0
        %v1039 = vpop.f32.mrf.mxu0
        %v1040 = vadd.f32 0.0, %v1039
        %v1041 = vpop.f32.mrf.mxu0
        %1042 = vdwg.mxu0
        %v1043 = vpack.c.bf16 %v976, %v973
        %v1044 = vpack.c.bf16 %v984, %v981
        %v1045 = vpack.c.bf16 %v992, %v989
        %v1046 = vpack.c.bf16 %v1000, %v997
        %v1047 = vpack.c.bf16 %v1008, %v1005
        %v1048 = vpack.c.bf16 %v1016, %v1013
        %v1049 = vpack.c.bf16 %v1024, %v1021
        %v1050 = vpack.c.bf16 %v1032, %v1029
        %v1051 = vpack.c.bf16 %v1040, %v1037
        %v1052 = vld [vmem:[%s6] sm:$0xf]
        %v1053 = vld [vmem:[%s6 + $0x4] sm:$0xf]
        %v1054 = vld [vmem:[%s6 + $0x8] sm:$0xf]
        %v1055 = vld [vmem:[%s6 + $0xc] sm:$0xf]
        %v1056 = vld [vmem:[%s6 + $0x10] sm:$0xf]
        %v1057 = vld [vmem:[%s6 + $0x14] sm:$0xf]
        %v1058 = vld [vmem:[%s6 + $0x18] sm:$0xf]
        %v1059 = vld [vmem:[%s6 + $0x1c] sm:$0xf]
        %v1060 = vld [vmem:[%s6 + $0x20] sm:$0xf]
        %v1061 = vld [vmem:[%s6 + $0x24] sm:$0xf]
        %v1062 = vld [vmem:[%s6 + $0x28] sm:$0xf]
        %v1063 = vld [vmem:[%s6 + $0x2c] sm:$0xf]
        %v1064 = vld [vmem:[%s6 + $0x30] sm:$0xf]
        %v1065 = vld [vmem:[%s6 + $0x34] sm:$0xf]
        %v1066 = vld [vmem:[%s6 + $0x38] sm:$0xf]
        %v1067 = vld [vmem:[%s6 + $0x3c] sm:$0xf]
        %v1068 = vld [vmem:[%s6 + $0x40] sm:$0xf]
        %v1069 = vld [vmem:[%s6 + $0x44] sm:$0xf]
        %1071 = vset.pattern.permute.xlu0 0
        %1072 = vperm.xlu0 %1071, %v1043
        %v1073 = vpop.permute.xlu0 %1072
        %1076 = vset.pattern.permute.xlu0 0
        %1077 = vperm.xlu0 %1076, %v1044
        %v1078 = vpop.permute.xlu0 %1077
        %1081 = vset.pattern.permute.xlu0 0
        %1082 = vperm.xlu0 %1081, %v1045
        %v1083 = vpop.permute.xlu0 %1082
        %1086 = vset.pattern.permute.xlu0 0
        %1087 = vperm.xlu0 %1086, %v1046
        %v1088 = vpop.permute.xlu0 %1087
        %1091 = vset.pattern.permute.xlu0 0
        %1092 = vperm.xlu0 %1091, %v1047
        %v1093 = vpop.permute.xlu0 %1092
        %1096 = vset.pattern.permute.xlu0 0
        %1097 = vperm.xlu0 %1096, %v1048
        %v1098 = vpop.permute.xlu0 %1097
        %1101 = vset.pattern.permute.xlu0 0
        %1102 = vperm.xlu0 %1101, %v1049
        %v1103 = vpop.permute.xlu0 %1102
        %1106 = vset.pattern.permute.xlu0 0
        %1107 = vperm.xlu0 %1106, %v1050
        %v1108 = vpop.permute.xlu0 %1107
        %1111 = vset.pattern.permute.xlu0 0
        %1112 = vperm.xlu0 %1111, %v1051
        %v1113 = vpop.permute.xlu0 %1112
        %v1133 = vunpack.c.l.b16 %v1052
        %v1134 = vunpack.c.l.b16 %v1053
        %v1135 = vunpack.c.l.b16 %v1054
        %v1136 = vunpack.c.l.b16 %v1055
        %v1137 = vunpack.c.l.b16 %v1056
        %v1138 = vunpack.c.l.b16 %v1057
        %v1139 = vunpack.c.l.b16 %v1058
        %v1140 = vunpack.c.l.b16 %v1059
        %v1141 = vunpack.c.l.b16 %v1060
        %v1142 = vunpack.c.l.b16 %v1061
        %v1143 = vunpack.c.l.b16 %v1062
        %v1144 = vunpack.c.l.b16 %v1063
        %v1145 = vunpack.c.l.b16 %v1064
        %v1146 = vunpack.c.l.b16 %v1065
        %v1147 = vunpack.c.l.b16 %v1066
        %v1148 = vunpack.c.l.b16 %v1067
        %v1149 = vunpack.c.l.b16 %v1068
        %v1150 = vunpack.c.l.b16 %v1069
        %v1151 = vpack.c.b16 %v1134, %v1133
        %v1152 = vpack.c.b16 %v1136, %v1135
        %v1153 = vpack.c.b16 %v1138, %v1137
        %v1154 = vpack.c.b16 %v1140, %v1139
        %v1155 = vpack.c.b16 %v1142, %v1141
        %v1156 = vpack.c.b16 %v1144, %v1143
        %v1157 = vpack.c.b16 %v1146, %v1145
        %v1158 = vpack.c.b16 %v1148, %v1147
        %v1159 = vpack.c.b16 %v1150, %v1149
        %v1169 = vmul.bf16 %v1073, %v1151
        %v1170 = vmul.bf16 %v1078, %v1152
        %v1171 = vmul.bf16 %v1083, %v1153
        %v1172 = vmul.bf16 %v1088, %v1154
        %v1173 = vmul.bf16 %v1093, %v1155
        %v1174 = vmul.bf16 %v1098, %v1156
        %v1175 = vmul.bf16 %v1103, %v1157
        %v1176 = vmul.bf16 %v1108, %v1158
        %v1177 = vmul.bf16 %v1113, %v1159
        %v1178 = vld [vmem:[#allocation8] sm:$0xff]
        %v1179 = vld [vmem:[#allocation8 + $0x8] sm:$0x33]
        %v1182 = vunpack.c.l.b16 %v1178
        %v1183 = vunpack.c.h.b16 %v1178
        %v1184 = vunpack.c.l.b16 %v1179
        %v1185 = vunpack.c.h.b16 %v1179
        %v1186 = vpack.c.b16 %v1184, %v1182
        %v1187 = vpack.c.b16 %v1185, %v1183
        %vm1189 = vcmask 130048
        %v1191 = vsel %vm1189, %v1187, 0
        %1193 = vmatprep.subr.bf16.mxu0 0
        %1194 = vmatpush1.bf16.msra.mxu0 %v1176
        %1195 = vmatprep.subr.bf16.mxu0 0
        %1196 = vmatpush1.bf16.msra.mxu0 %v1175
        %1197 = vmatprep.subr.bf16.mxu0 0
        %1198 = vmatpush1.bf16.msra.mxu0 %v1174
        %1199 = vmatprep.subr.bf16.mxu0 0
        %1200 = vmatpush1.bf16.msra.mxu0 %v1173
        %1201 = vmatprep.subr.bf16.mxu0 0
        %1202 = vmatpush1.bf16.msra.mxu0 %v1172
        %1203 = vmatprep.subr.bf16.mxu0 0
        %1204 = vmatpush1.bf16.msra.mxu0 %v1171
        %1205 = vmatprep.subr.bf16.mxu0 0
        %1206 = vmatpush1.bf16.msra.mxu0 %v1170
        %1207 = vmatprep.subr.bf16.mxu0 0
        %1208 = vmatpush1.bf16.msra.mxu0 %v1169
        %1209 = vmatprep.subr.bf16.mxu0 0
        %1210 = vmatpush2.bf16.msra.mxu0 0
        %1211 = vmatprep.subr.bf16.mxu0 0
        %1212 = vmatpush2.bf16.msra.mxu0 0
        %1213 = vmatprep.subr.bf16.mxu0 0
        %1214 = vmatpush2.bf16.msra.mxu0 0
        %1215 = vmatprep.subr.bf16.mxu0 0
        %1216 = vmatpush2.bf16.msra.mxu0 0
        %1217 = vmatprep.subr.bf16.mxu0 0
        %1218 = vmatpush2.bf16.msra.mxu0 0
        %1219 = vmatprep.subr.bf16.mxu0 0
        %1220 = vmatpush2.bf16.msra.mxu0 0
        %1221 = vmatprep.subr.bf16.mxu0 0
        %1222 = vmatpush2.bf16.msra.mxu0 0
        %1223 = vmatprep.subr.bf16.mxu0 0
        %1224 = vmatpush2.bf16.msra.mxu0 %v1177
        %1225 = vmatprep.mubr.bf16.mxu0 %v1191
        %1226 = vmatmul.mubr.bf16.gmra.mxu0 %v1186
        %v1227 = vpop.f32.mrf.mxu0
        %v1228 = vadd.f32 0.0, %v1227
        %v1229 = vpop.f32.mrf.mxu0
        %v1230 = vpop.f32.mrf.mxu0
        %v1231 = vadd.f32 0.0, %v1230
        %v1232 = vpop.f32.mrf.mxu0
        %1233 = vdwg.mxu0
        %v1234 = vpack.c.bf16 %v1231, %v1228
        %v1235 = vld [vmem:[#allocation10] sm:$0xff]
        %v1236 = vld [vmem:[#allocation10 + $0x8] sm:$0xff]
        %v1237 = vld [vmem:[#allocation10 + $0x10] sm:$0xf]
        %v1238 = vld [vmem:[#allocation10 + $0x14] sm:$0x33]
        %v1239 = vld [vmem:[#allocation10 + $0x1c] sm:$0x33]
        %v1240 = vld [vmem:[#allocation10 + $0x24] sm:$0x3]
        %v1247 = vunpack.c.l.b16 %v1235
        %v1248 = vunpack.c.h.b16 %v1235
        %v1249 = vunpack.c.l.b16 %v1236
        %v1250 = vunpack.c.h.b16 %v1236
        %v1251 = vunpack.c.l.b16 %v1237
        %v1252 = vunpack.c.l.b16 %v1238
        %v1253 = vunpack.c.h.b16 %v1238
        %v1254 = vunpack.c.l.b16 %v1239
        %v1255 = vunpack.c.h.b16 %v1239
        %v1256 = vunpack.c.l.b16 %v1240
        %v1257 = vpack.c.b16 %v1252, %v1247
        %v1258 = vpack.c.b16 %v1253, %v1248
        %v1259 = vpack.c.b16 %v1254, %v1249
        %v1260 = vpack.c.b16 %v1255, %v1250
        %v1261 = vpack.c.b16 %v1256, %v1251
        %vm1262 = vcmask 97280
        %v1264 = vsel %vm1262, %v1234, 0
        %vm1266 = vcmask 1045504
        %v1268 = vsel %vm1266, %v1257, 0
        %v1271 = vsel %vm1266, %v1258, 0
        %v1274 = vsel %vm1266, %v1259, 0
        %v1277 = vsel %vm1266, %v1260, 0
        %v1280 = vsel %vm1266, %v1261, 0
        %1282 = vmatprep.subr.bf16.mxu0 0
        %1283 = vmatpush1.bf16.msra.mxu0 0
        %1284 = vmatprep.subr.bf16.mxu0 0
        %1285 = vmatpush1.bf16.msra.mxu0 0
        %1286 = vmatprep.subr.bf16.mxu0 0
        %1287 = vmatpush1.bf16.msra.mxu0 0
        %1288 = vmatprep.subr.bf16.mxu0 0
        %1289 = vmatpush1.bf16.msra.mxu0 0
        %1290 = vmatprep.subr.bf16.mxu0 0
        %1291 = vmatpush1.bf16.msra.mxu0 0
        %1292 = vmatprep.subr.bf16.mxu0 0
        %1293 = vmatpush1.bf16.msra.mxu0 0
        %1294 = vmatprep.subr.bf16.mxu0 0
        %1295 = vmatpush1.bf16.msra.mxu0 0
        %1296 = vmatprep.subr.bf16.mxu0 %v1271
        %1297 = vmatpush1.bf16.msra.mxu0 %v1268
        %1298 = vmatprep.subr.bf16.mxu0 0
        %1299 = vmatpush2.bf16.msra.mxu0 0
        %1300 = vmatprep.subr.bf16.mxu0 0
        %1301 = vmatpush2.bf16.msra.mxu0 0
        %1302 = vmatprep.subr.bf16.mxu0 0
        %1303 = vmatpush2.bf16.msra.mxu0 0
        %1304 = vmatprep.subr.bf16.mxu0 0
        %1305 = vmatpush2.bf16.msra.mxu0 0
        %1306 = vmatprep.subr.bf16.mxu0 0
        %1307 = vmatpush2.bf16.msra.mxu0 0
        %1308 = vmatprep.subr.bf16.mxu0 0
        %1309 = vmatpush2.bf16.msra.mxu0 0
        %1310 = vmatprep.subr.bf16.mxu0 0
        %1311 = vmatpush2.bf16.msra.mxu0 0
        %1312 = vmatprep.subr.bf16.mxu0 0
        %1313 = vmatpush2.bf16.msra.mxu0 0
        %1314 = vmatprep.mubr.bf16.mxu0 0
        %1315 = vmatmul.mubr.bf16.gmra.mxu0 %v1264
        %v1316 = vpop.f32.mrf.mxu0
        %v1317 = vadd.f32 0.0, %v1316
        %v1318 = vpop.f32.mrf.mxu0
        %v1319 = vadd.f32 0.0, %v1318
        %v1320 = vpop.f32.mrf.mxu0
        %v1321 = vadd.f32 0.0, %v1320
        %v1322 = vpop.f32.mrf.mxu0
        %v1323 = vadd.f32 0.0, %v1322
        %1324 = vdwg.mxu0
        %1325 = vmatprep.subr.bf16.mxu0 0
        %1326 = vmatpush1.bf16.msra.mxu0 0
        %1327 = vmatprep.subr.bf16.mxu0 0
        %1328 = vmatpush1.bf16.msra.mxu0 0
        %1329 = vmatprep.subr.bf16.mxu0 0
        %1330 = vmatpush1.bf16.msra.mxu0 0
        %1331 = vmatprep.subr.bf16.mxu0 0
        %1332 = vmatpush1.bf16.msra.mxu0 0
        %1333 = vmatprep.subr.bf16.mxu0 0
        %1334 = vmatpush1.bf16.msra.mxu0 0
        %1335 = vmatprep.subr.bf16.mxu0 0
        %1336 = vmatpush1.bf16.msra.mxu0 0
        %1337 = vmatprep.subr.bf16.mxu0 0
        %1338 = vmatpush1.bf16.msra.mxu0 0
        %1339 = vmatprep.subr.bf16.mxu0 %v1277
        %1340 = vmatpush1.bf16.msra.mxu0 %v1274
        %1341 = vmatprep.subr.bf16.mxu0 0
        %1342 = vmatpush2.bf16.msra.mxu0 0
        %1343 = vmatprep.subr.bf16.mxu0 0
        %1344 = vmatpush2.bf16.msra.mxu0 0
        %1345 = vmatprep.subr.bf16.mxu0 0
        %1346 = vmatpush2.bf16.msra.mxu0 0
        %1347 = vmatprep.subr.bf16.mxu0 0
        %1348 = vmatpush2.bf16.msra.mxu0 0
        %1349 = vmatprep.subr.bf16.mxu0 0
        %1350 = vmatpush2.bf16.msra.mxu0 0
        %1351 = vmatprep.subr.bf16.mxu0 0
        %1352 = vmatpush2.bf16.msra.mxu0 0
        %1353 = vmatprep.subr.bf16.mxu0 0
        %1354 = vmatpush2.bf16.msra.mxu0 0
        %1355 = vmatprep.subr.bf16.mxu0 0
        %1356 = vmatpush2.bf16.msra.mxu0 0
        %1357 = vmatprep.mubr.bf16.mxu0 0
        %1358 = vmatmul.mubr.bf16.gmra.mxu0 %v1264
        %v1359 = vpop.f32.mrf.mxu0
        %v1360 = vadd.f32 0.0, %v1359
        %v1361 = vpop.f32.mrf.mxu0
        %v1362 = vadd.f32 0.0, %v1361
        %v1363 = vpop.f32.mrf.mxu0
        %v1364 = vadd.f32 0.0, %v1363
        %v1365 = vpop.f32.mrf.mxu0
        %v1366 = vadd.f32 0.0, %v1365
        %1367 = vdwg.mxu0
        %1368 = vmatprep.subr.bf16.mxu0 0
        %1369 = vmatpush1.bf16.msra.mxu0 0
        %1370 = vmatprep.subr.bf16.mxu0 0
        %1371 = vmatpush1.bf16.msra.mxu0 0
        %1372 = vmatprep.subr.bf16.mxu0 0
        %1373 = vmatpush1.bf16.msra.mxu0 0
        %1374 = vmatprep.subr.bf16.mxu0 0
        %1375 = vmatpush1.bf16.msra.mxu0 0
        %1376 = vmatprep.subr.bf16.mxu0 0
        %1377 = vmatpush1.bf16.msra.mxu0 0
        %1378 = vmatprep.subr.bf16.mxu0 0
        %1379 = vmatpush1.bf16.msra.mxu0 0
        %1380 = vmatprep.subr.bf16.mxu0 0
        %1381 = vmatpush1.bf16.msra.mxu0 0
        %1382 = vmatprep.subr.bf16.mxu0 0
        %1383 = vmatpush1.bf16.msra.mxu0 %v1280
        %1384 = vmatprep.subr.bf16.mxu0 0
        %1385 = vmatpush2.bf16.msra.mxu0 0
        %1386 = vmatprep.subr.bf16.mxu0 0
        %1387 = vmatpush2.bf16.msra.mxu0 0
        %1388 = vmatprep.subr.bf16.mxu0 0
        %1389 = vmatpush2.bf16.msra.mxu0 0
        %1390 = vmatprep.subr.bf16.mxu0 0
        %1391 = vmatpush2.bf16.msra.mxu0 0
        %1392 = vmatprep.subr.bf16.mxu0 0
        %1393 = vmatpush2.bf16.msra.mxu0 0
        %1394 = vmatprep.subr.bf16.mxu0 0
        %1395 = vmatpush2.bf16.msra.mxu0 0
        %1396 = vmatprep.subr.bf16.mxu0 0
        %1397 = vmatpush2.bf16.msra.mxu0 0
        %1398 = vmatprep.subr.bf16.mxu0 0
        %1399 = vmatpush2.bf16.msra.mxu0 0
        %1400 = vmatprep.mubr.bf16.mxu0 0
        %1401 = vmatmul.mubr.bf16.gmra.mxu0 %v1264
        %v1402 = vpop.f32.mrf.mxu0
        %v1403 = vadd.f32 0.0, %v1402
        %v1404 = vpop.f32.mrf.mxu0
        %v1405 = vpop.f32.mrf.mxu0
        %v1406 = vadd.f32 0.0, %v1405
        %v1407 = vpop.f32.mrf.mxu0
        %1408 = vdwg.mxu0
        %v1409 = vld [vmem:[%s8] sm:$0xf]
        %v1410 = vld [vmem:[%s8 + $0x4] sm:$0xf]
        %v1411 = vld [vmem:[%s8 + $0x8] sm:$0xf]
        %v1412 = vld [vmem:[%s8 + $0xc] sm:$0xf]
        %v1413 = vld [vmem:[%s8 + $0x10] sm:$0xf]
        %v1414 = vld [vmem:[%s8 + $0x14] sm:$0xf]
        %v1415 = vld [vmem:[%s8 + $0x18] sm:$0xf]
        %v1416 = vld [vmem:[%s8 + $0x1c] sm:$0xf]
        %v1417 = vld [vmem:[%s8 + $0x20] sm:$0xf]
        %v1418 = vld [vmem:[%s8 + $0x24] sm:$0xf]
        %v1419 = vld [vmem:[%s8 + $0x28] sm:$0xf]
        %v1420 = vld [vmem:[%s8 + $0x2c] sm:$0xf]
        %v1421 = vld [vmem:[%s8 + $0x30] sm:$0xf]
        %v1422 = vld [vmem:[%s8 + $0x34] sm:$0xf]
        %v1423 = vld [vmem:[%s8 + $0x38] sm:$0xf]
        %v1424 = vld [vmem:[%s8 + $0x3c] sm:$0xf]
        %v1425 = vld [vmem:[%s8 + $0x40] sm:$0xf]
        %v1426 = vld [vmem:[%s8 + $0x44] sm:$0xf]
        %v1427 = vld [vmem:[%s8 + $0x48] sm:$0xf]
        %v1428 = vld [vmem:[%s8 + $0x4c] sm:$0xf]
        %v1429 = vld [vmem:[%s8 + $0x50] sm:$0xf]
        %v1430 = vld [vmem:[%s8 + $0x54] sm:$0xf]
        %v1431 = vld [vmem:[%s8 + $0x58] sm:$0xf]
        %v1432 = vld [vmem:[%s8 + $0x5c] sm:$0xf]
        %v1433 = vld [vmem:[%s8 + $0x60] sm:$0xf]
        %v1434 = vld [vmem:[%s8 + $0x64] sm:$0xf]
        %v1435 = vld [vmem:[%s8 + $0x68] sm:$0xf]
        %v1436 = vld [vmem:[%s8 + $0x6c] sm:$0xf]
        %v1437 = vld [vmem:[%s8 + $0x70] sm:$0xf]
        %v1438 = vld [vmem:[%s8 + $0x74] sm:$0xf]
        %v1439 = vld [vmem:[%s8 + $0x78] sm:$0xf]
        %v1440 = vld [vmem:[%s8 + $0x7c] sm:$0xf]
        %v1441 = vld [vmem:[%s8 + $0x80] sm:$0xf]
        %v1442 = vld [vmem:[%s8 + $0x84] sm:$0xf]
        %v1443 = vld [vmem:[%s8 + $0x88] sm:$0xf]
        %v1444 = vld [vmem:[%s8 + $0x8c] sm:$0xf]
        %v1445 = vld [vmem:[%s8 + $0x90] sm:$0xf]
        %v1446 = vld [vmem:[%s8 + $0x94] sm:$0xf]
        %v1447 = vld [vmem:[%s8 + $0x98] sm:$0xf]
        %v1448 = vld [vmem:[%s8 + $0x9c] sm:$0xf]
        %v1449 = vld [vmem:[%s8 + $0xa0] sm:$0xf]
        %v1450 = vld [vmem:[%s8 + $0xa4] sm:$0xf]
        %v1451 = vld [vmem:[%s8 + $0xa8] sm:$0xf]
        %v1452 = vld [vmem:[%s8 + $0xac] sm:$0xf]
        %v1453 = vld [vmem:[%s8 + $0xb0] sm:$0xf]
        %v1454 = vld [vmem:[%s8 + $0xb4] sm:$0xf]
        %v1455 = vld [vmem:[%s8 + $0xb8] sm:$0xf]
        %v1456 = vld [vmem:[%s8 + $0xbc] sm:$0xf]
        %v1457 = vld [vmem:[%s8 + $0xc0] sm:$0xf]
        %v1458 = vld [vmem:[%s8 + $0xc4] sm:$0xf]
        %v1459 = vld [vmem:[%s8 + $0xc8] sm:$0xf]
        %v1460 = vld [vmem:[%s8 + $0xcc] sm:$0xf]
        %v1461 = vld [vmem:[%s8 + $0xd0] sm:$0xf]
        %v1462 = vld [vmem:[%s8 + $0xd4] sm:$0x1]
        %v1463 = vpack.c.bf16 %v1321, %v1317
        %v1464 = vpack.c.bf16 %v1323, %v1319
        %v1465 = vpack.c.bf16 %v1364, %v1360
        %v1466 = vpack.c.bf16 %v1366, %v1362
        %v1467 = vpack.c.bf16 %v1406, %v1403
        %s1468 = sld [smem:[#allocation2]]
        %v1469 = vstv %s1468
        %v1524 = vunpack.c.l.b16 %v1409
        %v1525 = vunpack.c.l.b16 %v1410
        %v1526 = vunpack.c.l.b16 %v1411
        %v1527 = vunpack.c.l.b16 %v1412
        %v1528 = vunpack.c.l.b16 %v1413
        %v1529 = vunpack.c.l.b16 %v1414
        %v1530 = vunpack.c.l.b16 %v1415
        %v1531 = vunpack.c.l.b16 %v1416
        %v1532 = vunpack.c.l.b16 %v1417
        %v1533 = vunpack.c.l.b16 %v1418
        %v1534 = vunpack.c.l.b16 %v1419
        %v1535 = vunpack.c.l.b16 %v1420
        %v1536 = vunpack.c.l.b16 %v1421
        %v1537 = vunpack.c.l.b16 %v1422
        %v1538 = vunpack.c.l.b16 %v1423
        %v1539 = vunpack.c.l.b16 %v1424
        %v1540 = vunpack.c.l.b16 %v1425
        %v1541 = vunpack.c.l.b16 %v1426
        %v1542 = vunpack.c.l.b16 %v1427
        %v1543 = vunpack.c.l.b16 %v1428
        %v1544 = vunpack.c.l.b16 %v1429
        %v1545 = vunpack.c.l.b16 %v1430
        %v1546 = vunpack.c.l.b16 %v1431
        %v1547 = vunpack.c.l.b16 %v1432
        %v1548 = vunpack.c.l.b16 %v1433
        %v1549 = vunpack.c.l.b16 %v1434
        %v1550 = vunpack.c.l.b16 %v1435
        %v1551 = vunpack.c.l.b16 %v1436
        %v1552 = vunpack.c.l.b16 %v1437
        %v1553 = vunpack.c.l.b16 %v1438
        %v1554 = vunpack.c.l.b16 %v1439
        %v1555 = vunpack.c.l.b16 %v1440
        %v1556 = vunpack.c.l.b16 %v1441
        %v1557 = vunpack.c.l.b16 %v1442
        %v1558 = vunpack.c.l.b16 %v1443
        %v1559 = vunpack.c.l.b16 %v1444
        %v1560 = vunpack.c.l.b16 %v1445
        %v1561 = vunpack.c.l.b16 %v1446
        %v1562 = vunpack.c.l.b16 %v1447
        %v1563 = vunpack.c.l.b16 %v1448
        %v1564 = vunpack.c.l.b16 %v1449
        %v1565 = vunpack.c.l.b16 %v1450
        %v1566 = vunpack.c.l.b16 %v1451
        %v1567 = vunpack.c.l.b16 %v1452
        %v1568 = vunpack.c.l.b16 %v1453
        %v1569 = vunpack.c.l.b16 %v1454
        %v1570 = vunpack.c.l.b16 %v1455
        %v1571 = vunpack.c.l.b16 %v1456
        %v1572 = vunpack.c.l.b16 %v1457
        %v1573 = vunpack.c.l.b16 %v1458
        %v1574 = vunpack.c.l.b16 %v1459
        %v1575 = vunpack.c.l.b16 %v1460
        %v1576 = vunpack.c.l.b16 %v1461
        %v1577 = vunpack.c.l.b16 %v1462
        %v1578 = vpack.c.b16 %v1525, %v1524
        %v1579 = vpack.c.b16 %v1527, %v1526
        %v1580 = vpack.c.b16 %v1529, %v1528
        %v1581 = vpack.c.b16 %v1531, %v1530
        %v1582 = vpack.c.b16 %v1533, %v1532
        %v1583 = vpack.c.b16 %v1535, %v1534
        %v1584 = vpack.c.b16 %v1537, %v1536
        %v1585 = vpack.c.b16 %v1539, %v1538
        %v1586 = vpack.c.b16 %v1541, %v1540
        %v1587 = vpack.c.b16 %v1543, %v1542
        %v1588 = vpack.c.b16 %v1545, %v1544
        %v1589 = vpack.c.b16 %v1547, %v1546
        %v1590 = vpack.c.b16 %v1549, %v1548
        %v1591 = vpack.c.b16 %v1551, %v1550
        %v1592 = vpack.c.b16 %v1553, %v1552
        %v1593 = vpack.c.b16 %v1555, %v1554
        %v1594 = vpack.c.b16 %v1557, %v1556
        %v1595 = vpack.c.b16 %v1559, %v1558
        %v1596 = vpack.c.b16 %v1561, %v1560
        %v1597 = vpack.c.b16 %v1563, %v1562
        %v1598 = vpack.c.b16 %v1565, %v1564
        %v1599 = vpack.c.b16 %v1567, %v1566
        %v1600 = vpack.c.b16 %v1569, %v1568
        %v1601 = vpack.c.b16 %v1571, %v1570
        %v1602 = vpack.c.b16 %v1573, %v1572
        %v1603 = vpack.c.b16 %v1575, %v1574
        %v1604 = vpack.c.b16 %v1577, %v1576
        %v1606 = vsel %vm1262, %v1578, 0
        %v1609 = vsel %vm1262, %v1579, 0
        %v1612 = vsel %vm1262, %v1580, 0
        %v1615 = vsel %vm1262, %v1581, 0
        %v1618 = vsel %vm1262, %v1582, 0
        %v1621 = vsel %vm1262, %v1583, 0
        %v1624 = vsel %vm1262, %v1584, 0
        %v1627 = vsel %vm1262, %v1585, 0
        %v1630 = vsel %vm1262, %v1586, 0
        %v1633 = vsel %vm1262, %v1587, 0
        %v1636 = vsel %vm1262, %v1588, 0
        %v1639 = vsel %vm1262, %v1589, 0
        %v1642 = vsel %vm1262, %v1590, 0
        %v1645 = vsel %vm1262, %v1591, 0
        %v1648 = vsel %vm1262, %v1592, 0
        %v1651 = vsel %vm1262, %v1593, 0
        %v1654 = vsel %vm1262, %v1594, 0
        %v1657 = vsel %vm1262, %v1595, 0
        %v1660 = vsel %vm1262, %v1596, 0
        %v1663 = vsel %vm1262, %v1597, 0
        %v1666 = vsel %vm1262, %v1598, 0
        %v1669 = vsel %vm1262, %v1599, 0
        %v1672 = vsel %vm1262, %v1600, 0
        %v1675 = vsel %vm1262, %v1601, 0
        %v1678 = vsel %vm1262, %v1602, 0
        %v1681 = vsel %vm1262, %v1603, 0
        %v1684 = vsel %vm1262, %v1604, 0
        %v1687 = vsel %vm1266, %v1463, 0
        %v1690 = vsel %vm1266, %v1464, 0
        %v1693 = vsel %vm1266, %v1465, 0
        %v1696 = vsel %vm1266, %v1466, 0
        %v1699 = vsel %vm1266, %v1467, 0
        %1701 = vmatprep.subr.bf16.mxu0 0
        %1702 = vmatpush1.bf16.msra.mxu0 0
        %1703 = vmatprep.subr.bf16.mxu0 0
        %1704 = vmatpush1.bf16.msra.mxu0 0
        %1705 = vmatprep.subr.bf16.mxu0 0
        %1706 = vmatpush1.bf16.msra.mxu0 0
        %1707 = vmatprep.subr.bf16.mxu0 0
        %1708 = vmatpush1.bf16.msra.mxu0 0
        %1709 = vmatprep.subr.bf16.mxu0 0
        %1710 = vmatpush1.bf16.msra.mxu0 0
        %1711 = vmatprep.subr.bf16.mxu0 0
        %1712 = vmatpush1.bf16.msra.mxu0 0
        %1713 = vmatprep.subr.bf16.mxu0 0
        %1714 = vmatpush1.bf16.msra.mxu0 0
        %1715 = vmatprep.subr.bf16.mxu0 %v1690
        %1716 = vmatpush1.bf16.msra.mxu0 %v1687
        %1717 = vmatprep.subr.bf16.mxu0 0
        %1718 = vmatpush2.bf16.msra.mxu0 0
        %1719 = vmatprep.subr.bf16.mxu0 0
        %1720 = vmatpush2.bf16.msra.mxu0 0
        %1721 = vmatprep.subr.bf16.mxu0 0
        %1722 = vmatpush2.bf16.msra.mxu0 0
        %1723 = vmatprep.subr.bf16.mxu0 0
        %1724 = vmatpush2.bf16.msra.mxu0 0
        %1725 = vmatprep.subr.bf16.mxu0 0
        %1726 = vmatpush2.bf16.msra.mxu0 0
        %1727 = vmatprep.subr.bf16.mxu0 0
        %1728 = vmatpush2.bf16.msra.mxu0 0
        %1729 = vmatprep.subr.bf16.mxu0 0
        %1730 = vmatpush2.bf16.msra.mxu0 0
        %1731 = vmatprep.subr.bf16.mxu0 0
        %1732 = vmatpush2.bf16.msra.mxu0 0
        %1733 = vmatprep.mubr.bf16.mxu0 0
        %1734 = vmatmul.mubr.bf16.gmra.mxu0 %v1606
        %v1735 = vpop.f32.mrf.mxu0
        %v1736 = vadd.f32 %v1469, %v1735
        %v1737 = vpop.f32.mrf.mxu0
        %v1738 = vadd.f32 %v1469, %v1737
        %v1739 = vpop.f32.mrf.mxu0
        %v1740 = vadd.f32 %v1469, %v1739
        %v1741 = vpop.f32.mrf.mxu0
        %v1742 = vadd.f32 %v1469, %v1741
        %1743 = vmatprep.mubr.bf16.mxu0 0
        %1744 = vmatmul.mubr.bf16.gmra.mxu0 %v1609
        %v1745 = vpop.f32.mrf.mxu0
        %v1746 = vadd.f32 %v1469, %v1745
        %v1747 = vpop.f32.mrf.mxu0
        %v1748 = vadd.f32 %v1469, %v1747
        %v1749 = vpop.f32.mrf.mxu0
        %v1750 = vadd.f32 %v1469, %v1749
        %v1751 = vpop.f32.mrf.mxu0
        %v1752 = vadd.f32 %v1469, %v1751
        %1753 = vmatprep.mubr.bf16.mxu0 0
        %1754 = vmatmul.mubr.bf16.gmra.mxu0 %v1612
        %v1755 = vpop.f32.mrf.mxu0
        %v1756 = vadd.f32 %v1469, %v1755
        %v1757 = vpop.f32.mrf.mxu0
        %v1758 = vadd.f32 %v1469, %v1757
        %v1759 = vpop.f32.mrf.mxu0
        %v1760 = vadd.f32 %v1469, %v1759
        %v1761 = vpop.f32.mrf.mxu0
        %v1762 = vadd.f32 %v1469, %v1761
        %1763 = vmatprep.mubr.bf16.mxu0 0
        %1764 = vmatmul.mubr.bf16.gmra.mxu0 %v1615
        %v1765 = vpop.f32.mrf.mxu0
        %v1766 = vadd.f32 %v1469, %v1765
        %v1767 = vpop.f32.mrf.mxu0
        %v1768 = vadd.f32 %v1469, %v1767
        %v1769 = vpop.f32.mrf.mxu0
        %v1770 = vadd.f32 %v1469, %v1769
        %v1771 = vpop.f32.mrf.mxu0
        %v1772 = vadd.f32 %v1469, %v1771
        %1773 = vmatprep.mubr.bf16.mxu0 0
        %1774 = vmatmul.mubr.bf16.gmra.mxu0 %v1618
        %v1775 = vpop.f32.mrf.mxu0
        %v1776 = vadd.f32 %v1469, %v1775
        %v1777 = vpop.f32.mrf.mxu0
        %v1778 = vadd.f32 %v1469, %v1777
        %v1779 = vpop.f32.mrf.mxu0
        %v1780 = vadd.f32 %v1469, %v1779
        %v1781 = vpop.f32.mrf.mxu0
        %v1782 = vadd.f32 %v1469, %v1781
        %1783 = vmatprep.mubr.bf16.mxu0 0
        %1784 = vmatmul.mubr.bf16.gmra.mxu0 %v1621
        %v1785 = vpop.f32.mrf.mxu0
        %v1786 = vadd.f32 %v1469, %v1785
        %v1787 = vpop.f32.mrf.mxu0
        %v1788 = vadd.f32 %v1469, %v1787
        %v1789 = vpop.f32.mrf.mxu0
        %v1790 = vadd.f32 %v1469, %v1789
        %v1791 = vpop.f32.mrf.mxu0
        %v1792 = vadd.f32 %v1469, %v1791
        %1793 = vmatprep.mubr.bf16.mxu0 0
        %1794 = vmatmul.mubr.bf16.gmra.mxu0 %v1624
        %v1795 = vpop.f32.mrf.mxu0
        %v1796 = vadd.f32 %v1469, %v1795
        %v1797 = vpop.f32.mrf.mxu0
        %v1798 = vadd.f32 %v1469, %v1797
        %v1799 = vpop.f32.mrf.mxu0
        %v1800 = vadd.f32 %v1469, %v1799
        %v1801 = vpop.f32.mrf.mxu0
        %v1802 = vadd.f32 %v1469, %v1801
        %1803 = vmatprep.mubr.bf16.mxu0 0
        %1804 = vmatmul.mubr.bf16.gmra.mxu0 %v1627
        %v1805 = vpop.f32.mrf.mxu0
        %v1806 = vadd.f32 %v1469, %v1805
        %v1807 = vpop.f32.mrf.mxu0
        %v1808 = vadd.f32 %v1469, %v1807
        %v1809 = vpop.f32.mrf.mxu0
        %v1810 = vadd.f32 %v1469, %v1809
        %v1811 = vpop.f32.mrf.mxu0
        %v1812 = vadd.f32 %v1469, %v1811
        %1813 = vmatprep.mubr.bf16.mxu0 0
        %1814 = vmatmul.mubr.bf16.gmra.mxu0 %v1630
        %v1815 = vpop.f32.mrf.mxu0
        %v1816 = vadd.f32 %v1469, %v1815
        %v1817 = vpop.f32.mrf.mxu0
        %v1818 = vadd.f32 %v1469, %v1817
        %v1819 = vpop.f32.mrf.mxu0
        %v1820 = vadd.f32 %v1469, %v1819
        %v1821 = vpop.f32.mrf.mxu0
        %v1822 = vadd.f32 %v1469, %v1821
        %1823 = vmatprep.mubr.bf16.mxu0 0
        %1824 = vmatmul.mubr.bf16.gmra.mxu0 %v1633
        %v1825 = vpop.f32.mrf.mxu0
        %v1826 = vadd.f32 %v1469, %v1825
        %v1827 = vpop.f32.mrf.mxu0
        %v1828 = vadd.f32 %v1469, %v1827
        %v1829 = vpop.f32.mrf.mxu0
        %v1830 = vadd.f32 %v1469, %v1829
        %v1831 = vpop.f32.mrf.mxu0
        %v1832 = vadd.f32 %v1469, %v1831
        %1833 = vmatprep.mubr.bf16.mxu0 0
        %1834 = vmatmul.mubr.bf16.gmra.mxu0 %v1636
        %v1835 = vpop.f32.mrf.mxu0
        %v1836 = vadd.f32 %v1469, %v1835
        %v1837 = vpop.f32.mrf.mxu0
        %v1838 = vadd.f32 %v1469, %v1837
        %v1839 = vpop.f32.mrf.mxu0
        %v1840 = vadd.f32 %v1469, %v1839
        %v1841 = vpop.f32.mrf.mxu0
        %v1842 = vadd.f32 %v1469, %v1841
        %1843 = vmatprep.mubr.bf16.mxu0 0
        %1844 = vmatmul.mubr.bf16.gmra.mxu0 %v1639
        %v1845 = vpop.f32.mrf.mxu0
        %v1846 = vadd.f32 %v1469, %v1845
        %v1847 = vpop.f32.mrf.mxu0
        %v1848 = vadd.f32 %v1469, %v1847
        %v1849 = vpop.f32.mrf.mxu0
        %v1850 = vadd.f32 %v1469, %v1849
        %v1851 = vpop.f32.mrf.mxu0
        %v1852 = vadd.f32 %v1469, %v1851
        %1853 = vmatprep.mubr.bf16.mxu0 0
        %1854 = vmatmul.mubr.bf16.gmra.mxu0 %v1642
        %v1855 = vpop.f32.mrf.mxu0
        %v1856 = vadd.f32 %v1469, %v1855
        %v1857 = vpop.f32.mrf.mxu0
        %v1858 = vadd.f32 %v1469, %v1857
        %v1859 = vpop.f32.mrf.mxu0
        %v1860 = vadd.f32 %v1469, %v1859
        %v1861 = vpop.f32.mrf.mxu0
        %v1862 = vadd.f32 %v1469, %v1861
        %1863 = vmatprep.mubr.bf16.mxu0 0
        %1864 = vmatmul.mubr.bf16.gmra.mxu0 %v1645
        %v1865 = vpop.f32.mrf.mxu0
        %v1866 = vadd.f32 %v1469, %v1865
        %v1867 = vpop.f32.mrf.mxu0
        %v1868 = vadd.f32 %v1469, %v1867
        %v1869 = vpop.f32.mrf.mxu0
        %v1870 = vadd.f32 %v1469, %v1869
        %v1871 = vpop.f32.mrf.mxu0
        %v1872 = vadd.f32 %v1469, %v1871
        %1873 = vmatprep.mubr.bf16.mxu0 0
        %1874 = vmatmul.mubr.bf16.gmra.mxu0 %v1648
        %v1875 = vpop.f32.mrf.mxu0
        %v1876 = vadd.f32 %v1469, %v1875
        %v1877 = vpop.f32.mrf.mxu0
        %v1878 = vadd.f32 %v1469, %v1877
        %v1879 = vpop.f32.mrf.mxu0
        %v1880 = vadd.f32 %v1469, %v1879
        %v1881 = vpop.f32.mrf.mxu0
        %v1882 = vadd.f32 %v1469, %v1881
        %1883 = vmatprep.mubr.bf16.mxu0 0
        %1884 = vmatmul.mubr.bf16.gmra.mxu0 %v1651
        %v1885 = vpop.f32.mrf.mxu0
        %v1886 = vadd.f32 %v1469, %v1885
        %v1887 = vpop.f32.mrf.mxu0
        %v1888 = vadd.f32 %v1469, %v1887
        %v1889 = vpop.f32.mrf.mxu0
        %v1890 = vadd.f32 %v1469, %v1889
        %v1891 = vpop.f32.mrf.mxu0
        %v1892 = vadd.f32 %v1469, %v1891
        %1893 = vmatprep.mubr.bf16.mxu0 0
        %1894 = vmatmul.mubr.bf16.gmra.mxu0 %v1654
        %v1895 = vpop.f32.mrf.mxu0
        %v1896 = vadd.f32 %v1469, %v1895
        %v1897 = vpop.f32.mrf.mxu0
        %v1898 = vadd.f32 %v1469, %v1897
        %v1899 = vpop.f32.mrf.mxu0
        %v1900 = vadd.f32 %v1469, %v1899
        %v1901 = vpop.f32.mrf.mxu0
        %v1902 = vadd.f32 %v1469, %v1901
        %1903 = vmatprep.mubr.bf16.mxu0 0
        %1904 = vmatmul.mubr.bf16.gmra.mxu0 %v1657
        %v1905 = vpop.f32.mrf.mxu0
        %v1906 = vadd.f32 %v1469, %v1905
        %v1907 = vpop.f32.mrf.mxu0
        %v1908 = vadd.f32 %v1469, %v1907
        %v1909 = vpop.f32.mrf.mxu0
        %v1910 = vadd.f32 %v1469, %v1909
        %v1911 = vpop.f32.mrf.mxu0
        %v1912 = vadd.f32 %v1469, %v1911
        %1913 = vmatprep.mubr.bf16.mxu0 0
        %1914 = vmatmul.mubr.bf16.gmra.mxu0 %v1660
        %v1915 = vpop.f32.mrf.mxu0
        %v1916 = vadd.f32 %v1469, %v1915
        %v1917 = vpop.f32.mrf.mxu0
        %v1918 = vadd.f32 %v1469, %v1917
        %v1919 = vpop.f32.mrf.mxu0
        %v1920 = vadd.f32 %v1469, %v1919
        %v1921 = vpop.f32.mrf.mxu0
        %v1922 = vadd.f32 %v1469, %v1921
        %1923 = vmatprep.mubr.bf16.mxu0 0
        %1924 = vmatmul.mubr.bf16.gmra.mxu0 %v1663
        %v1925 = vpop.f32.mrf.mxu0
        %v1926 = vadd.f32 %v1469, %v1925
        %v1927 = vpop.f32.mrf.mxu0
        %v1928 = vadd.f32 %v1469, %v1927
        %v1929 = vpop.f32.mrf.mxu0
        %v1930 = vadd.f32 %v1469, %v1929
        %v1931 = vpop.f32.mrf.mxu0
        %v1932 = vadd.f32 %v1469, %v1931
        %1933 = vmatprep.mubr.bf16.mxu0 0
        %1934 = vmatmul.mubr.bf16.gmra.mxu0 %v1666
        %v1935 = vpop.f32.mrf.mxu0
        %v1936 = vadd.f32 %v1469, %v1935
        %v1937 = vpop.f32.mrf.mxu0
        %v1938 = vadd.f32 %v1469, %v1937
        %v1939 = vpop.f32.mrf.mxu0
        %v1940 = vadd.f32 %v1469, %v1939
        %v1941 = vpop.f32.mrf.mxu0
        %v1942 = vadd.f32 %v1469, %v1941
        %1943 = vmatprep.mubr.bf16.mxu0 0
        %1944 = vmatmul.mubr.bf16.gmra.mxu0 %v1669
        %v1945 = vpop.f32.mrf.mxu0
        %v1946 = vadd.f32 %v1469, %v1945
        %v1947 = vpop.f32.mrf.mxu0
        %v1948 = vadd.f32 %v1469, %v1947
        %v1949 = vpop.f32.mrf.mxu0
        %v1950 = vadd.f32 %v1469, %v1949
        %v1951 = vpop.f32.mrf.mxu0
        %v1952 = vadd.f32 %v1469, %v1951
        %1953 = vmatprep.mubr.bf16.mxu0 0
        %1954 = vmatmul.mubr.bf16.gmra.mxu0 %v1672
        %v1955 = vpop.f32.mrf.mxu0
        %v1956 = vadd.f32 %v1469, %v1955
        %v1957 = vpop.f32.mrf.mxu0
        %v1958 = vadd.f32 %v1469, %v1957
        %v1959 = vpop.f32.mrf.mxu0
        %v1960 = vadd.f32 %v1469, %v1959
        %v1961 = vpop.f32.mrf.mxu0
        %v1962 = vadd.f32 %v1469, %v1961
        %1963 = vmatprep.mubr.bf16.mxu0 0
        %1964 = vmatmul.mubr.bf16.gmra.mxu0 %v1675
        %v1965 = vpop.f32.mrf.mxu0
        %v1966 = vadd.f32 %v1469, %v1965
        %v1967 = vpop.f32.mrf.mxu0
        %v1968 = vadd.f32 %v1469, %v1967
        %v1969 = vpop.f32.mrf.mxu0
        %v1970 = vadd.f32 %v1469, %v1969
        %v1971 = vpop.f32.mrf.mxu0
        %v1972 = vadd.f32 %v1469, %v1971
        %1973 = vmatprep.mubr.bf16.mxu0 0
        %1974 = vmatmul.mubr.bf16.gmra.mxu0 %v1678
        %v1975 = vpop.f32.mrf.mxu0
        %v1976 = vadd.f32 %v1469, %v1975
        %v1977 = vpop.f32.mrf.mxu0
        %v1978 = vadd.f32 %v1469, %v1977
        %v1979 = vpop.f32.mrf.mxu0
        %v1980 = vadd.f32 %v1469, %v1979
        %v1981 = vpop.f32.mrf.mxu0
        %v1982 = vadd.f32 %v1469, %v1981
        %1983 = vmatprep.mubr.bf16.mxu0 0
        %1984 = vmatmul.mubr.bf16.gmra.mxu0 %v1681
        %v1985 = vpop.f32.mrf.mxu0
        %v1986 = vadd.f32 %v1469, %v1985
        %v1987 = vpop.f32.mrf.mxu0
        %v1988 = vadd.f32 %v1469, %v1987
        %v1989 = vpop.f32.mrf.mxu0
        %v1990 = vadd.f32 %v1469, %v1989
        %v1991 = vpop.f32.mrf.mxu0
        %v1992 = vadd.f32 %v1469, %v1991
        %1993 = vmatprep.mubr.bf16.mxu0 0
        %1994 = vmatmul.mubr.bf16.gmra.mxu0 %v1684
        %v1995 = vpop.f32.mrf.mxu0
        %v1996 = vadd.f32 %v1469, %v1995
        %v1997 = vpop.f32.mrf.mxu0
        %v1998 = vadd.f32 %v1469, %v1997
        %v1999 = vpop.f32.mrf.mxu0
        %v2000 = vadd.f32 %v1469, %v1999
        %v2001 = vpop.f32.mrf.mxu0
        %v2002 = vadd.f32 %v1469, %v2001
        %2003 = vdwg.mxu0
        %2004 = vmatprep.subr.bf16.mxu0 0
        %2005 = vmatpush1.bf16.msra.mxu0 0
        %2006 = vmatprep.subr.bf16.mxu0 0
        %2007 = vmatpush1.bf16.msra.mxu0 0
        %2008 = vmatprep.subr.bf16.mxu0 0
        %2009 = vmatpush1.bf16.msra.mxu0 0
        %2010 = vmatprep.subr.bf16.mxu0 0
        %2011 = vmatpush1.bf16.msra.mxu0 0
        %2012 = vmatprep.subr.bf16.mxu0 0
        %2013 = vmatpush1.bf16.msra.mxu0 0
        %2014 = vmatprep.subr.bf16.mxu0 0
        %2015 = vmatpush1.bf16.msra.mxu0 0
        %2016 = vmatprep.subr.bf16.mxu0 0
        %2017 = vmatpush1.bf16.msra.mxu0 0
        %2018 = vmatprep.subr.bf16.mxu0 %v1696
        %2019 = vmatpush1.bf16.msra.mxu0 %v1693
        %2020 = vmatprep.subr.bf16.mxu0 0
        %2021 = vmatpush2.bf16.msra.mxu0 0
        %2022 = vmatprep.subr.bf16.mxu0 0
        %2023 = vmatpush2.bf16.msra.mxu0 0
        %2024 = vmatprep.subr.bf16.mxu0 0
        %2025 = vmatpush2.bf16.msra.mxu0 0
        %2026 = vmatprep.subr.bf16.mxu0 0
        %2027 = vmatpush2.bf16.msra.mxu0 0
        %2028 = vmatprep.subr.bf16.mxu0 0
        %2029 = vmatpush2.bf16.msra.mxu0 0
        %2030 = vmatprep.subr.bf16.mxu0 0
        %2031 = vmatpush2.bf16.msra.mxu0 0
        %2032 = vmatprep.subr.bf16.mxu0 0
        %2033 = vmatpush2.bf16.msra.mxu0 0
        %2034 = vmatprep.subr.bf16.mxu0 0
        %2035 = vmatpush2.bf16.msra.mxu0 0
        %2036 = vmatprep.mubr.bf16.mxu0 0
        %2037 = vmatmul.mubr.bf16.gmra.mxu0 %v1606
        %v2038 = vpop.f32.mrf.mxu0
        %v2039 = vadd.f32 %v1469, %v2038
        %v2040 = vpop.f32.mrf.mxu0
        %v2041 = vadd.f32 %v1469, %v2040
        %v2042 = vpop.f32.mrf.mxu0
        %v2043 = vadd.f32 %v1469, %v2042
        %v2044 = vpop.f32.mrf.mxu0
        %v2045 = vadd.f32 %v1469, %v2044
        %2046 = vmatprep.mubr.bf16.mxu0 0
        %2047 = vmatmul.mubr.bf16.gmra.mxu0 %v1609
        %v2048 = vpop.f32.mrf.mxu0
        %v2049 = vadd.f32 %v1469, %v2048
        %v2050 = vpop.f32.mrf.mxu0
        %v2051 = vadd.f32 %v1469, %v2050
        %v2052 = vpop.f32.mrf.mxu0
        %v2053 = vadd.f32 %v1469, %v2052
        %v2054 = vpop.f32.mrf.mxu0
        %v2055 = vadd.f32 %v1469, %v2054
        %2056 = vmatprep.mubr.bf16.mxu0 0
        %2057 = vmatmul.mubr.bf16.gmra.mxu0 %v1612
        %v2058 = vpop.f32.mrf.mxu0
        %v2059 = vadd.f32 %v1469, %v2058
        %v2060 = vpop.f32.mrf.mxu0
        %v2061 = vadd.f32 %v1469, %v2060
        %v2062 = vpop.f32.mrf.mxu0
        %v2063 = vadd.f32 %v1469, %v2062
        %v2064 = vpop.f32.mrf.mxu0
        %v2065 = vadd.f32 %v1469, %v2064
        %2066 = vmatprep.mubr.bf16.mxu0 0
        %2067 = vmatmul.mubr.bf16.gmra.mxu0 %v1615
        %v2068 = vpop.f32.mrf.mxu0
        %v2069 = vadd.f32 %v1469, %v2068
        %v2070 = vpop.f32.mrf.mxu0
        %v2071 = vadd.f32 %v1469, %v2070
        %v2072 = vpop.f32.mrf.mxu0
        %v2073 = vadd.f32 %v1469, %v2072
        %v2074 = vpop.f32.mrf.mxu0
        %v2075 = vadd.f32 %v1469, %v2074
        %2076 = vmatprep.mubr.bf16.mxu0 0
        %2077 = vmatmul.mubr.bf16.gmra.mxu0 %v1618
        %v2078 = vpop.f32.mrf.mxu0
        %v2079 = vadd.f32 %v1469, %v2078
        %v2080 = vpop.f32.mrf.mxu0
        %v2081 = vadd.f32 %v1469, %v2080
        %v2082 = vpop.f32.mrf.mxu0
        %v2083 = vadd.f32 %v1469, %v2082
        %v2084 = vpop.f32.mrf.mxu0
        %v2085 = vadd.f32 %v1469, %v2084
        %2086 = vmatprep.mubr.bf16.mxu0 0
        %2087 = vmatmul.mubr.bf16.gmra.mxu0 %v1621
        %v2088 = vpop.f32.mrf.mxu0
        %v2089 = vadd.f32 %v1469, %v2088
        %v2090 = vpop.f32.mrf.mxu0
        %v2091 = vadd.f32 %v1469, %v2090
        %v2092 = vpop.f32.mrf.mxu0
        %v2093 = vadd.f32 %v1469, %v2092
        %v2094 = vpop.f32.mrf.mxu0
        %v2095 = vadd.f32 %v1469, %v2094
        %2096 = vmatprep.mubr.bf16.mxu0 0
        %2097 = vmatmul.mubr.bf16.gmra.mxu0 %v1624
        %v2098 = vpop.f32.mrf.mxu0
        %v2099 = vadd.f32 %v1469, %v2098
        %v2100 = vpop.f32.mrf.mxu0
        %v2101 = vadd.f32 %v1469, %v2100
        %v2102 = vpop.f32.mrf.mxu0
        %v2103 = vadd.f32 %v1469, %v2102
        %v2104 = vpop.f32.mrf.mxu0
        %v2105 = vadd.f32 %v1469, %v2104
        %2106 = vmatprep.mubr.bf16.mxu0 0
        %2107 = vmatmul.mubr.bf16.gmra.mxu0 %v1627
        %v2108 = vpop.f32.mrf.mxu0
        %v2109 = vadd.f32 %v1469, %v2108
        %v2110 = vpop.f32.mrf.mxu0
        %v2111 = vadd.f32 %v1469, %v2110
        %v2112 = vpop.f32.mrf.mxu0
        %v2113 = vadd.f32 %v1469, %v2112
        %v2114 = vpop.f32.mrf.mxu0
        %v2115 = vadd.f32 %v1469, %v2114
        %2116 = vmatprep.mubr.bf16.mxu0 0
        %2117 = vmatmul.mubr.bf16.gmra.mxu0 %v1630
        %v2118 = vpop.f32.mrf.mxu0
        %v2119 = vadd.f32 %v1469, %v2118
        %v2120 = vpop.f32.mrf.mxu0
        %v2121 = vadd.f32 %v1469, %v2120
        %v2122 = vpop.f32.mrf.mxu0
        %v2123 = vadd.f32 %v1469, %v2122
        %v2124 = vpop.f32.mrf.mxu0
        %v2125 = vadd.f32 %v1469, %v2124
        %2126 = vmatprep.mubr.bf16.mxu0 0
        %2127 = vmatmul.mubr.bf16.gmra.mxu0 %v1633
        %v2128 = vpop.f32.mrf.mxu0
        %v2129 = vadd.f32 %v1469, %v2128
        %v2130 = vpop.f32.mrf.mxu0
        %v2131 = vadd.f32 %v1469, %v2130
        %v2132 = vpop.f32.mrf.mxu0
        %v2133 = vadd.f32 %v1469, %v2132
        %v2134 = vpop.f32.mrf.mxu0
        %v2135 = vadd.f32 %v1469, %v2134
        %2136 = vmatprep.mubr.bf16.mxu0 0
        %2137 = vmatmul.mubr.bf16.gmra.mxu0 %v1636
        %v2138 = vpop.f32.mrf.mxu0
        %v2139 = vadd.f32 %v1469, %v2138
        %v2140 = vpop.f32.mrf.mxu0
        %v2141 = vadd.f32 %v1469, %v2140
        %v2142 = vpop.f32.mrf.mxu0
        %v2143 = vadd.f32 %v1469, %v2142
        %v2144 = vpop.f32.mrf.mxu0
        %v2145 = vadd.f32 %v1469, %v2144
        %2146 = vmatprep.mubr.bf16.mxu0 0
        %2147 = vmatmul.mubr.bf16.gmra.mxu0 %v1639
        %v2148 = vpop.f32.mrf.mxu0
        %v2149 = vadd.f32 %v1469, %v2148
        %v2150 = vpop.f32.mrf.mxu0
        %v2151 = vadd.f32 %v1469, %v2150
        %v2152 = vpop.f32.mrf.mxu0
        %v2153 = vadd.f32 %v1469, %v2152
        %v2154 = vpop.f32.mrf.mxu0
        %v2155 = vadd.f32 %v1469, %v2154
        %2156 = vmatprep.mubr.bf16.mxu0 0
        %2157 = vmatmul.mubr.bf16.gmra.mxu0 %v1642
        %v2158 = vpop.f32.mrf.mxu0
        %v2159 = vadd.f32 %v1469, %v2158
        %v2160 = vpop.f32.mrf.mxu0
        %v2161 = vadd.f32 %v1469, %v2160
        %v2162 = vpop.f32.mrf.mxu0
        %v2163 = vadd.f32 %v1469, %v2162
        %v2164 = vpop.f32.mrf.mxu0
        %v2165 = vadd.f32 %v1469, %v2164
        %2166 = vmatprep.mubr.bf16.mxu0 0
        %2167 = vmatmul.mubr.bf16.gmra.mxu0 %v1645
        %v2168 = vpop.f32.mrf.mxu0
        %v2169 = vadd.f32 %v1469, %v2168
        %v2170 = vpop.f32.mrf.mxu0
        %v2171 = vadd.f32 %v1469, %v2170
        %v2172 = vpop.f32.mrf.mxu0
        %v2173 = vadd.f32 %v1469, %v2172
        %v2174 = vpop.f32.mrf.mxu0
        %v2175 = vadd.f32 %v1469, %v2174
        %2176 = vmatprep.mubr.bf16.mxu0 0
        %2177 = vmatmul.mubr.bf16.gmra.mxu0 %v1648
        %v2178 = vpop.f32.mrf.mxu0
        %v2179 = vadd.f32 %v1469, %v2178
        %v2180 = vpop.f32.mrf.mxu0
        %v2181 = vadd.f32 %v1469, %v2180
        %v2182 = vpop.f32.mrf.mxu0
        %v2183 = vadd.f32 %v1469, %v2182
        %v2184 = vpop.f32.mrf.mxu0
        %v2185 = vadd.f32 %v1469, %v2184
        %2186 = vmatprep.mubr.bf16.mxu0 0
        %2187 = vmatmul.mubr.bf16.gmra.mxu0 %v1651
        %v2188 = vpop.f32.mrf.mxu0
        %v2189 = vadd.f32 %v1469, %v2188
        %v2190 = vpop.f32.mrf.mxu0
        %v2191 = vadd.f32 %v1469, %v2190
        %v2192 = vpop.f32.mrf.mxu0
        %v2193 = vadd.f32 %v1469, %v2192
        %v2194 = vpop.f32.mrf.mxu0
        %v2195 = vadd.f32 %v1469, %v2194
        %2196 = vmatprep.mubr.bf16.mxu0 0
        %2197 = vmatmul.mubr.bf16.gmra.mxu0 %v1654
        %v2198 = vpop.f32.mrf.mxu0
        %v2199 = vadd.f32 %v1469, %v2198
        %v2200 = vpop.f32.mrf.mxu0
        %v2201 = vadd.f32 %v1469, %v2200
        %v2202 = vpop.f32.mrf.mxu0
        %v2203 = vadd.f32 %v1469, %v2202
        %v2204 = vpop.f32.mrf.mxu0
        %v2205 = vadd.f32 %v1469, %v2204
        %2206 = vmatprep.mubr.bf16.mxu0 0
        %2207 = vmatmul.mubr.bf16.gmra.mxu0 %v1657
        %v2208 = vpop.f32.mrf.mxu0
        %v2209 = vadd.f32 %v1469, %v2208
        %v2210 = vpop.f32.mrf.mxu0
        %v2211 = vadd.f32 %v1469, %v2210
        %v2212 = vpop.f32.mrf.mxu0
        %v2213 = vadd.f32 %v1469, %v2212
        %v2214 = vpop.f32.mrf.mxu0
        %v2215 = vadd.f32 %v1469, %v2214
        %2216 = vmatprep.mubr.bf16.mxu0 0
        %2217 = vmatmul.mubr.bf16.gmra.mxu0 %v1660
        %v2218 = vpop.f32.mrf.mxu0
        %v2219 = vadd.f32 %v1469, %v2218
        %v2220 = vpop.f32.mrf.mxu0
        %v2221 = vadd.f32 %v1469, %v2220
        %v2222 = vpop.f32.mrf.mxu0
        %v2223 = vadd.f32 %v1469, %v2222
        %v2224 = vpop.f32.mrf.mxu0
        %v2225 = vadd.f32 %v1469, %v2224
        %2226 = vmatprep.mubr.bf16.mxu0 0
        %2227 = vmatmul.mubr.bf16.gmra.mxu0 %v1663
        %v2228 = vpop.f32.mrf.mxu0
        %v2229 = vadd.f32 %v1469, %v2228
        %v2230 = vpop.f32.mrf.mxu0
        %v2231 = vadd.f32 %v1469, %v2230
        %v2232 = vpop.f32.mrf.mxu0
        %v2233 = vadd.f32 %v1469, %v2232
        %v2234 = vpop.f32.mrf.mxu0
        %v2235 = vadd.f32 %v1469, %v2234
        %2236 = vmatprep.mubr.bf16.mxu0 0
        %2237 = vmatmul.mubr.bf16.gmra.mxu0 %v1666
        %v2238 = vpop.f32.mrf.mxu0
        %v2239 = vadd.f32 %v1469, %v2238
        %v2240 = vpop.f32.mrf.mxu0
        %v2241 = vadd.f32 %v1469, %v2240
        %v2242 = vpop.f32.mrf.mxu0
        %v2243 = vadd.f32 %v1469, %v2242
        %v2244 = vpop.f32.mrf.mxu0
        %v2245 = vadd.f32 %v1469, %v2244
        %2246 = vmatprep.mubr.bf16.mxu0 0
        %2247 = vmatmul.mubr.bf16.gmra.mxu0 %v1669
        %v2248 = vpop.f32.mrf.mxu0
        %v2249 = vadd.f32 %v1469, %v2248
        %v2250 = vpop.f32.mrf.mxu0
        %v2251 = vadd.f32 %v1469, %v2250
        %v2252 = vpop.f32.mrf.mxu0
        %v2253 = vadd.f32 %v1469, %v2252
        %v2254 = vpop.f32.mrf.mxu0
        %v2255 = vadd.f32 %v1469, %v2254
        %2256 = vmatprep.mubr.bf16.mxu0 0
        %2257 = vmatmul.mubr.bf16.gmra.mxu0 %v1672
        %v2258 = vpop.f32.mrf.mxu0
        %v2259 = vadd.f32 %v1469, %v2258
        %v2260 = vpop.f32.mrf.mxu0
        %v2261 = vadd.f32 %v1469, %v2260
        %v2262 = vpop.f32.mrf.mxu0
        %v2263 = vadd.f32 %v1469, %v2262
        %v2264 = vpop.f32.mrf.mxu0
        %v2265 = vadd.f32 %v1469, %v2264
        %2266 = vmatprep.mubr.bf16.mxu0 0
        %2267 = vmatmul.mubr.bf16.gmra.mxu0 %v1675
        %v2268 = vpop.f32.mrf.mxu0
        %v2269 = vadd.f32 %v1469, %v2268
        %v2270 = vpop.f32.mrf.mxu0
        %v2271 = vadd.f32 %v1469, %v2270
        %v2272 = vpop.f32.mrf.mxu0
        %v2273 = vadd.f32 %v1469, %v2272
        %v2274 = vpop.f32.mrf.mxu0
        %v2275 = vadd.f32 %v1469, %v2274
        %2276 = vmatprep.mubr.bf16.mxu0 0
        %2277 = vmatmul.mubr.bf16.gmra.mxu0 %v1678
        %v2278 = vpop.f32.mrf.mxu0
        %v2279 = vadd.f32 %v1469, %v2278
        %v2280 = vpop.f32.mrf.mxu0
        %v2281 = vadd.f32 %v1469, %v2280
        %v2282 = vpop.f32.mrf.mxu0
        %v2283 = vadd.f32 %v1469, %v2282
        %v2284 = vpop.f32.mrf.mxu0
        %v2285 = vadd.f32 %v1469, %v2284
        %2286 = vmatprep.mubr.bf16.mxu0 0
        %2287 = vmatmul.mubr.bf16.gmra.mxu0 %v1681
        %v2288 = vpop.f32.mrf.mxu0
        %v2289 = vadd.f32 %v1469, %v2288
        %v2290 = vpop.f32.mrf.mxu0
        %v2291 = vadd.f32 %v1469, %v2290
        %v2292 = vpop.f32.mrf.mxu0
        %v2293 = vadd.f32 %v1469, %v2292
        %v2294 = vpop.f32.mrf.mxu0
        %v2295 = vadd.f32 %v1469, %v2294
        %2296 = vmatprep.mubr.bf16.mxu0 0
        %2297 = vmatmul.mubr.bf16.gmra.mxu0 %v1684
        %v2298 = vpop.f32.mrf.mxu0
        %v2299 = vadd.f32 %v1469, %v2298
        %v2300 = vpop.f32.mrf.mxu0
        %v2301 = vadd.f32 %v1469, %v2300
        %v2302 = vpop.f32.mrf.mxu0
        %v2303 = vadd.f32 %v1469, %v2302
        %v2304 = vpop.f32.mrf.mxu0
        %v2305 = vadd.f32 %v1469, %v2304
        %2306 = vdwg.mxu0
        %2307 = vmatprep.subr.bf16.mxu0 0
        %2308 = vmatpush1.bf16.msra.mxu0 0
        %2309 = vmatprep.subr.bf16.mxu0 0
        %2310 = vmatpush1.bf16.msra.mxu0 0
        %2311 = vmatprep.subr.bf16.mxu0 0
        %2312 = vmatpush1.bf16.msra.mxu0 0
        %2313 = vmatprep.subr.bf16.mxu0 0
        %2314 = vmatpush1.bf16.msra.mxu0 0
        %2315 = vmatprep.subr.bf16.mxu0 0
        %2316 = vmatpush1.bf16.msra.mxu0 0
        %2317 = vmatprep.subr.bf16.mxu0 0
        %2318 = vmatpush1.bf16.msra.mxu0 0
        %2319 = vmatprep.subr.bf16.mxu0 0
        %2320 = vmatpush1.bf16.msra.mxu0 0
        %2321 = vmatprep.subr.bf16.mxu0 0
        %2322 = vmatpush1.bf16.msra.mxu0 %v1699
        %2323 = vmatprep.subr.bf16.mxu0 0
        %2324 = vmatpush2.bf16.msra.mxu0 0
        %2325 = vmatprep.subr.bf16.mxu0 0
        %2326 = vmatpush2.bf16.msra.mxu0 0
        %2327 = vmatprep.subr.bf16.mxu0 0
        %2328 = vmatpush2.bf16.msra.mxu0 0
        %2329 = vmatprep.subr.bf16.mxu0 0
        %2330 = vmatpush2.bf16.msra.mxu0 0
        %2331 = vmatprep.subr.bf16.mxu0 0
        %2332 = vmatpush2.bf16.msra.mxu0 0
        %2333 = vmatprep.subr.bf16.mxu0 0
        %2334 = vmatpush2.bf16.msra.mxu0 0
        %2335 = vmatprep.subr.bf16.mxu0 0
        %2336 = vmatpush2.bf16.msra.mxu0 0
        %2337 = vmatprep.subr.bf16.mxu0 0
        %2338 = vmatpush2.bf16.msra.mxu0 0
        %2339 = vmatprep.mubr.bf16.mxu0 0
        %2340 = vmatmul.mubr.bf16.gmra.mxu0 %v1606
        %v2341 = vpop.f32.mrf.mxu0
        %v2342 = vadd.f32 %v1469, %v2341
        %v2343 = vpop.f32.mrf.mxu0
        %v2344 = vpop.f32.mrf.mxu0
        %v2345 = vadd.f32 %v1469, %v2344
        %v2346 = vpop.f32.mrf.mxu0
        %2347 = vmatprep.mubr.bf16.mxu0 0
        %2348 = vmatmul.mubr.bf16.gmra.mxu0 %v1609
        %v2349 = vpop.f32.mrf.mxu0
        %v2350 = vadd.f32 %v1469, %v2349
        %v2351 = vpop.f32.mrf.mxu0
        %v2352 = vpop.f32.mrf.mxu0
        %v2353 = vadd.f32 %v1469, %v2352
        %v2354 = vpop.f32.mrf.mxu0
        %2355 = vmatprep.mubr.bf16.mxu0 0
        %2356 = vmatmul.mubr.bf16.gmra.mxu0 %v1612
        %v2357 = vpop.f32.mrf.mxu0
        %v2358 = vadd.f32 %v1469, %v2357
        %v2359 = vpop.f32.mrf.mxu0
        %v2360 = vpop.f32.mrf.mxu0
        %v2361 = vadd.f32 %v1469, %v2360
        %v2362 = vpop.f32.mrf.mxu0
        %2363 = vmatprep.mubr.bf16.mxu0 0
        %2364 = vmatmul.mubr.bf16.gmra.mxu0 %v1615
        %v2365 = vpop.f32.mrf.mxu0
        %v2366 = vadd.f32 %v1469, %v2365
        %v2367 = vpop.f32.mrf.mxu0
        %v2368 = vpop.f32.mrf.mxu0
        %v2369 = vadd.f32 %v1469, %v2368
        %v2370 = vpop.f32.mrf.mxu0
        %2371 = vmatprep.mubr.bf16.mxu0 0
        %2372 = vmatmul.mubr.bf16.gmra.mxu0 %v1618
        %v2373 = vpop.f32.mrf.mxu0
        %v2374 = vadd.f32 %v1469, %v2373
        %v2375 = vpop.f32.mrf.mxu0
        %v2376 = vpop.f32.mrf.mxu0
        %v2377 = vadd.f32 %v1469, %v2376
        %v2378 = vpop.f32.mrf.mxu0
        %2379 = vmatprep.mubr.bf16.mxu0 0
        %2380 = vmatmul.mubr.bf16.gmra.mxu0 %v1621
        %v2381 = vpop.f32.mrf.mxu0
        %v2382 = vadd.f32 %v1469, %v2381
        %v2383 = vpop.f32.mrf.mxu0
        %v2384 = vpop.f32.mrf.mxu0
        %v2385 = vadd.f32 %v1469, %v2384
        %v2386 = vpop.f32.mrf.mxu0
        %2387 = vmatprep.mubr.bf16.mxu0 0
        %2388 = vmatmul.mubr.bf16.gmra.mxu0 %v1624
        %v2389 = vpop.f32.mrf.mxu0
        %v2390 = vadd.f32 %v1469, %v2389
        %v2391 = vpop.f32.mrf.mxu0
        %v2392 = vpop.f32.mrf.mxu0
        %v2393 = vadd.f32 %v1469, %v2392
        %v2394 = vpop.f32.mrf.mxu0
        %2395 = vmatprep.mubr.bf16.mxu0 0
        %2396 = vmatmul.mubr.bf16.gmra.mxu0 %v1627
        %v2397 = vpop.f32.mrf.mxu0
        %v2398 = vadd.f32 %v1469, %v2397
        %v2399 = vpop.f32.mrf.mxu0
        %v2400 = vpop.f32.mrf.mxu0
        %v2401 = vadd.f32 %v1469, %v2400
        %v2402 = vpop.f32.mrf.mxu0
        %2403 = vmatprep.mubr.bf16.mxu0 0
        %2404 = vmatmul.mubr.bf16.gmra.mxu0 %v1630
        %v2405 = vpop.f32.mrf.mxu0
        %v2406 = vadd.f32 %v1469, %v2405
        %v2407 = vpop.f32.mrf.mxu0
        %v2408 = vpop.f32.mrf.mxu0
        %v2409 = vadd.f32 %v1469, %v2408
        %v2410 = vpop.f32.mrf.mxu0
        %2411 = vmatprep.mubr.bf16.mxu0 0
        %2412 = vmatmul.mubr.bf16.gmra.mxu0 %v1633
        %v2413 = vpop.f32.mrf.mxu0
        %v2414 = vadd.f32 %v1469, %v2413
        %v2415 = vpop.f32.mrf.mxu0
        %v2416 = vpop.f32.mrf.mxu0
        %v2417 = vadd.f32 %v1469, %v2416
        %v2418 = vpop.f32.mrf.mxu0
        %2419 = vmatprep.mubr.bf16.mxu0 0
        %2420 = vmatmul.mubr.bf16.gmra.mxu0 %v1636
        %v2421 = vpop.f32.mrf.mxu0
        %v2422 = vadd.f32 %v1469, %v2421
        %v2423 = vpop.f32.mrf.mxu0
        %v2424 = vpop.f32.mrf.mxu0
        %v2425 = vadd.f32 %v1469, %v2424
        %v2426 = vpop.f32.mrf.mxu0
        %2427 = vmatprep.mubr.bf16.mxu0 0
        %2428 = vmatmul.mubr.bf16.gmra.mxu0 %v1639
        %v2429 = vpop.f32.mrf.mxu0
        %v2430 = vadd.f32 %v1469, %v2429
        %v2431 = vpop.f32.mrf.mxu0
        %v2432 = vpop.f32.mrf.mxu0
        %v2433 = vadd.f32 %v1469, %v2432
        %v2434 = vpop.f32.mrf.mxu0
        %2435 = vmatprep.mubr.bf16.mxu0 0
        %2436 = vmatmul.mubr.bf16.gmra.mxu0 %v1642
        %v2437 = vpop.f32.mrf.mxu0
        %v2438 = vadd.f32 %v1469, %v2437
        %v2439 = vpop.f32.mrf.mxu0
        %v2440 = vpop.f32.mrf.mxu0
        %v2441 = vadd.f32 %v1469, %v2440
        %v2442 = vpop.f32.mrf.mxu0
        %2443 = vmatprep.mubr.bf16.mxu0 0
        %2444 = vmatmul.mubr.bf16.gmra.mxu0 %v1645
        %v2445 = vpop.f32.mrf.mxu0
        %v2446 = vadd.f32 %v1469, %v2445
        %v2447 = vpop.f32.mrf.mxu0
        %v2448 = vpop.f32.mrf.mxu0
        %v2449 = vadd.f32 %v1469, %v2448
        %v2450 = vpop.f32.mrf.mxu0
        %2451 = vmatprep.mubr.bf16.mxu0 0
        %2452 = vmatmul.mubr.bf16.gmra.mxu0 %v1648
        %v2453 = vpop.f32.mrf.mxu0
        %v2454 = vadd.f32 %v1469, %v2453
        %v2455 = vpop.f32.mrf.mxu0
        %v2456 = vpop.f32.mrf.mxu0
        %v2457 = vadd.f32 %v1469, %v2456
        %v2458 = vpop.f32.mrf.mxu0
        %2459 = vmatprep.mubr.bf16.mxu0 0
        %2460 = vmatmul.mubr.bf16.gmra.mxu0 %v1651
        %v2461 = vpop.f32.mrf.mxu0
        %v2462 = vadd.f32 %v1469, %v2461
        %v2463 = vpop.f32.mrf.mxu0
        %v2464 = vpop.f32.mrf.mxu0
        %v2465 = vadd.f32 %v1469, %v2464
        %v2466 = vpop.f32.mrf.mxu0
        %2467 = vmatprep.mubr.bf16.mxu0 0
        %2468 = vmatmul.mubr.bf16.gmra.mxu0 %v1654
        %v2469 = vpop.f32.mrf.mxu0
        %v2470 = vadd.f32 %v1469, %v2469
        %v2471 = vpop.f32.mrf.mxu0
        %v2472 = vpop.f32.mrf.mxu0
        %v2473 = vadd.f32 %v1469, %v2472
        %v2474 = vpop.f32.mrf.mxu0
        %2475 = vmatprep.mubr.bf16.mxu0 0
        %2476 = vmatmul.mubr.bf16.gmra.mxu0 %v1657
        %v2477 = vpop.f32.mrf.mxu0
        %v2478 = vadd.f32 %v1469, %v2477
        %v2479 = vpop.f32.mrf.mxu0
        %v2480 = vpop.f32.mrf.mxu0
        %v2481 = vadd.f32 %v1469, %v2480
        %v2482 = vpop.f32.mrf.mxu0
        %2483 = vmatprep.mubr.bf16.mxu0 0
        %2484 = vmatmul.mubr.bf16.gmra.mxu0 %v1660
        %v2485 = vpop.f32.mrf.mxu0
        %v2486 = vadd.f32 %v1469, %v2485
        %v2487 = vpop.f32.mrf.mxu0
        %v2488 = vpop.f32.mrf.mxu0
        %v2489 = vadd.f32 %v1469, %v2488
        %v2490 = vpop.f32.mrf.mxu0
        %2491 = vmatprep.mubr.bf16.mxu0 0
        %2492 = vmatmul.mubr.bf16.gmra.mxu0 %v1663
        %v2493 = vpop.f32.mrf.mxu0
        %v2494 = vadd.f32 %v1469, %v2493
        %v2495 = vpop.f32.mrf.mxu0
        %v2496 = vpop.f32.mrf.mxu0
        %v2497 = vadd.f32 %v1469, %v2496
        %v2498 = vpop.f32.mrf.mxu0
        %2499 = vmatprep.mubr.bf16.mxu0 0
        %2500 = vmatmul.mubr.bf16.gmra.mxu0 %v1666
        %v2501 = vpop.f32.mrf.mxu0
        %v2502 = vadd.f32 %v1469, %v2501
        %v2503 = vpop.f32.mrf.mxu0
        %v2504 = vpop.f32.mrf.mxu0
        %v2505 = vadd.f32 %v1469, %v2504
        %v2506 = vpop.f32.mrf.mxu0
        %2507 = vmatprep.mubr.bf16.mxu0 0
        %2508 = vmatmul.mubr.bf16.gmra.mxu0 %v1669
        %v2509 = vpop.f32.mrf.mxu0
        %v2510 = vadd.f32 %v1469, %v2509
        %v2511 = vpop.f32.mrf.mxu0
        %v2512 = vpop.f32.mrf.mxu0
        %v2513 = vadd.f32 %v1469, %v2512
        %v2514 = vpop.f32.mrf.mxu0
        %2515 = vmatprep.mubr.bf16.mxu0 0
        %2516 = vmatmul.mubr.bf16.gmra.mxu0 %v1672
        %v2517 = vpop.f32.mrf.mxu0
        %v2518 = vadd.f32 %v1469, %v2517
        %v2519 = vpop.f32.mrf.mxu0
        %v2520 = vpop.f32.mrf.mxu0
        %v2521 = vadd.f32 %v1469, %v2520
        %v2522 = vpop.f32.mrf.mxu0
        %2523 = vmatprep.mubr.bf16.mxu0 0
        %2524 = vmatmul.mubr.bf16.gmra.mxu0 %v1675
        %v2525 = vpop.f32.mrf.mxu0
        %v2526 = vadd.f32 %v1469, %v2525
        %v2527 = vpop.f32.mrf.mxu0
        %v2528 = vpop.f32.mrf.mxu0
        %v2529 = vadd.f32 %v1469, %v2528
        %v2530 = vpop.f32.mrf.mxu0
        %2531 = vmatprep.mubr.bf16.mxu0 0
        %2532 = vmatmul.mubr.bf16.gmra.mxu0 %v1678
        %v2533 = vpop.f32.mrf.mxu0
        %v2534 = vadd.f32 %v1469, %v2533
        %v2535 = vpop.f32.mrf.mxu0
        %v2536 = vpop.f32.mrf.mxu0
        %v2537 = vadd.f32 %v1469, %v2536
        %v2538 = vpop.f32.mrf.mxu0
        %2539 = vmatprep.mubr.bf16.mxu0 0
        %2540 = vmatmul.mubr.bf16.gmra.mxu0 %v1681
        %v2541 = vpop.f32.mrf.mxu0
        %v2542 = vadd.f32 %v1469, %v2541
        %v2543 = vpop.f32.mrf.mxu0
        %v2544 = vpop.f32.mrf.mxu0
        %v2545 = vadd.f32 %v1469, %v2544
        %v2546 = vpop.f32.mrf.mxu0
        %2547 = vmatprep.mubr.bf16.mxu0 0
        %2548 = vmatmul.mubr.bf16.gmra.mxu0 %v1684
        %v2549 = vpop.f32.mrf.mxu0
        %v2550 = vadd.f32 %v1469, %v2549
        %v2551 = vpop.f32.mrf.mxu0
        %v2552 = vpop.f32.mrf.mxu0
        %v2553 = vadd.f32 %v1469, %v2552
        %v2554 = vpop.f32.mrf.mxu0
        %2555 = vdwg.mxu0
        %2556 = vst [vmem:[%s456] sm:$0xff] %v1736
        %2557 = vst [vmem:[%s456 + $0x8] sm:$0xff] %v1738
        %2558 = vst [vmem:[%s456 + $0x10] sm:$0xff] %v2039
        %2559 = vst [vmem:[%s456 + $0x18] sm:$0xff] %v2041
        %2560 = vst.msk [vmem:[%s456 + $0x20] sm:$0xff] %vm552, %v2342
        %2561 = vst [vmem:[%s456 + $0x28] sm:$0xff] %v1740
        %2562 = vst [vmem:[%s456 + $0x30] sm:$0xff] %v1742
        %2563 = vst [vmem:[%s456 + $0x38] sm:$0xff] %v2043
        %2564 = vst [vmem:[%s456 + $0x40] sm:$0xff] %v2045
        %2565 = vst.msk [vmem:[%s456 + $0x48] sm:$0xff] %vm552, %v2345
        %2566 = vst [vmem:[%s456 + $0x50] sm:$0xff] %v1746
        %2567 = vst [vmem:[%s456 + $0x58] sm:$0xff] %v1748
        %2568 = vst [vmem:[%s456 + $0x60] sm:$0xff] %v2049
        %2569 = vst [vmem:[%s456 + $0x68] sm:$0xff] %v2051
        %2570 = vst.msk [vmem:[%s456 + $0x70] sm:$0xff] %vm552, %v2350
        %2571 = vst [vmem:[%s456 + $0x78] sm:$0xff] %v1750
        %2572 = vst [vmem:[%s456 + $0x80] sm:$0xff] %v1752
        %2573 = vst [vmem:[%s456 + $0x88] sm:$0xff] %v2053
        %2574 = vst [vmem:[%s456 + $0x90] sm:$0xff] %v2055
        %2575 = vst.msk [vmem:[%s456 + $0x98] sm:$0xff] %vm552, %v2353
        %2576 = vst [vmem:[%s456 + $0xa0] sm:$0xff] %v1756
        %2577 = vst [vmem:[%s456 + $0xa8] sm:$0xff] %v1758
        %2578 = vst [vmem:[%s456 + $0xb0] sm:$0xff] %v2059
        %2579 = vst [vmem:[%s456 + $0xb8] sm:$0xff] %v2061
        %2580 = vst.msk [vmem:[%s456 + $0xc0] sm:$0xff] %vm552, %v2358
        %2581 = vst [vmem:[%s456 + $0xc8] sm:$0xff] %v1760
        %2582 = vst [vmem:[%s456 + $0xd0] sm:$0xff] %v1762
        %2583 = vst [vmem:[%s456 + $0xd8] sm:$0xff] %v2063
        %2584 = vst [vmem:[%s456 + $0xe0] sm:$0xff] %v2065
        %2585 = vst.msk [vmem:[%s456 + $0xe8] sm:$0xff] %vm552, %v2361
        %2586 = vst [vmem:[%s456 + $0xf0] sm:$0xff] %v1766
        %2587 = vst [vmem:[%s456 + $0xf8] sm:$0xff] %v1768
        %2588 = vst [vmem:[%s456 + $0x100] sm:$0xff] %v2069
        %2589 = vst [vmem:[%s456 + $0x108] sm:$0xff] %v2071
        %2590 = vst.msk [vmem:[%s456 + $0x110] sm:$0xff] %vm552, %v2366
        %2591 = vst [vmem:[%s456 + $0x118] sm:$0xff] %v1770
        %2592 = vst [vmem:[%s456 + $0x120] sm:$0xff] %v1772
        %2593 = vst [vmem:[%s456 + $0x128] sm:$0xff] %v2073
        %2594 = vst [vmem:[%s456 + $0x130] sm:$0xff] %v2075
        %2595 = vst.msk [vmem:[%s456 + $0x138] sm:$0xff] %vm552, %v2369
        %2596 = vst [vmem:[%s456 + $0x140] sm:$0xff] %v1776
        %2597 = vst [vmem:[%s456 + $0x148] sm:$0xff] %v1778
        %2598 = vst [vmem:[%s456 + $0x150] sm:$0xff] %v2079
        %2599 = vst [vmem:[%s456 + $0x158] sm:$0xff] %v2081
        %2600 = vst.msk [vmem:[%s456 + $0x160] sm:$0xff] %vm552, %v2374
        %2601 = vst [vmem:[%s456 + $0x168] sm:$0xff] %v1780
        %2602 = vst [vmem:[%s456 + $0x170] sm:$0xff] %v1782
        %2603 = vst [vmem:[%s456 + $0x178] sm:$0xff] %v2083
        %2604 = vst [vmem:[%s456 + $0x180] sm:$0xff] %v2085
        %2605 = vst.msk [vmem:[%s456 + $0x188] sm:$0xff] %vm552, %v2377
        %2606 = vst [vmem:[%s456 + $0x190] sm:$0xff] %v1786
        %2607 = vst [vmem:[%s456 + $0x198] sm:$0xff] %v1788
        %2608 = vst [vmem:[%s456 + $0x1a0] sm:$0xff] %v2089
        %2609 = vst [vmem:[%s456 + $0x1a8] sm:$0xff] %v2091
        %2610 = vst.msk [vmem:[%s456 + $0x1b0] sm:$0xff] %vm552, %v2382
        %2611 = vst [vmem:[%s456 + $0x1b8] sm:$0xff] %v1790
        %2612 = vst [vmem:[%s456 + $0x1c0] sm:$0xff] %v1792
        %2613 = vst [vmem:[%s456 + $0x1c8] sm:$0xff] %v2093
        %2614 = vst [vmem:[%s456 + $0x1d0] sm:$0xff] %v2095
        %2615 = vst.msk [vmem:[%s456 + $0x1d8] sm:$0xff] %vm552, %v2385
        %2616 = vst [vmem:[%s456 + $0x1e0] sm:$0xff] %v1796
        %2617 = vst [vmem:[%s456 + $0x1e8] sm:$0xff] %v1798
        %2618 = vst [vmem:[%s456 + $0x1f0] sm:$0xff] %v2099
        %2619 = vst [vmem:[%s456 + $0x1f8] sm:$0xff] %v2101
        %2620 = vst.msk [vmem:[%s456 + $0x200] sm:$0xff] %vm552, %v2390
        %2621 = vst [vmem:[%s456 + $0x208] sm:$0xff] %v1800
        %2622 = vst [vmem:[%s456 + $0x210] sm:$0xff] %v1802
        %2623 = vst [vmem:[%s456 + $0x218] sm:$0xff] %v2103
        %2624 = vst [vmem:[%s456 + $0x220] sm:$0xff] %v2105
        %2625 = vst.msk [vmem:[%s456 + $0x228] sm:$0xff] %vm552, %v2393
        %2626 = vst [vmem:[%s456 + $0x230] sm:$0xff] %v1806
        %2627 = vst [vmem:[%s456 + $0x238] sm:$0xff] %v1808
        %2628 = vst [vmem:[%s456 + $0x240] sm:$0xff] %v2109
        %2629 = vst [vmem:[%s456 + $0x248] sm:$0xff] %v2111
        %2630 = vst.msk [vmem:[%s456 + $0x250] sm:$0xff] %vm552, %v2398
        %2631 = vst [vmem:[%s456 + $0x258] sm:$0xff] %v1810
        %2632 = vst [vmem:[%s456 + $0x260] sm:$0xff] %v1812
        %2633 = vst [vmem:[%s456 + $0x268] sm:$0xff] %v2113
        %2634 = vst [vmem:[%s456 + $0x270] sm:$0xff] %v2115
        %2635 = vst.msk [vmem:[%s456 + $0x278] sm:$0xff] %vm552, %v2401
        %2636 = vst [vmem:[%s456 + $0x280] sm:$0xff] %v1816
        %2637 = vst [vmem:[%s456 + $0x288] sm:$0xff] %v1818
        %2638 = vst [vmem:[%s456 + $0x290] sm:$0xff] %v2119
        %2639 = vst [vmem:[%s456 + $0x298] sm:$0xff] %v2121
        %2640 = vst.msk [vmem:[%s456 + $0x2a0] sm:$0xff] %vm552, %v2406
        %2641 = vst [vmem:[%s456 + $0x2a8] sm:$0xff] %v1820
        %2642 = vst [vmem:[%s456 + $0x2b0] sm:$0xff] %v1822
        %2643 = vst [vmem:[%s456 + $0x2b8] sm:$0xff] %v2123
        %2644 = vst [vmem:[%s456 + $0x2c0] sm:$0xff] %v2125
        %2645 = vst.msk [vmem:[%s456 + $0x2c8] sm:$0xff] %vm552, %v2409
        %2646 = vst [vmem:[%s456 + $0x2d0] sm:$0xff] %v1826
        %2647 = vst [vmem:[%s456 + $0x2d8] sm:$0xff] %v1828
        %2648 = vst [vmem:[%s456 + $0x2e0] sm:$0xff] %v2129
        %2649 = vst [vmem:[%s456 + $0x2e8] sm:$0xff] %v2131
        %2650 = vst.msk [vmem:[%s456 + $0x2f0] sm:$0xff] %vm552, %v2414
        %2651 = vst [vmem:[%s456 + $0x2f8] sm:$0xff] %v1830
        %2652 = vst [vmem:[%s456 + $0x300] sm:$0xff] %v1832
        %2653 = vst [vmem:[%s456 + $0x308] sm:$0xff] %v2133
        %2654 = vst [vmem:[%s456 + $0x310] sm:$0xff] %v2135
        %2655 = vst.msk [vmem:[%s456 + $0x318] sm:$0xff] %vm552, %v2417
        %2656 = vst [vmem:[%s456 + $0x320] sm:$0xff] %v1836
        %2657 = vst [vmem:[%s456 + $0x328] sm:$0xff] %v1838
        %2658 = vst [vmem:[%s456 + $0x330] sm:$0xff] %v2139
        %2659 = vst [vmem:[%s456 + $0x338] sm:$0xff] %v2141
        %2660 = vst.msk [vmem:[%s456 + $0x340] sm:$0xff] %vm552, %v2422
        %2661 = vst [vmem:[%s456 + $0x348] sm:$0xff] %v1840
        %2662 = vst [vmem:[%s456 + $0x350] sm:$0xff] %v1842
        %2663 = vst [vmem:[%s456 + $0x358] sm:$0xff] %v2143
        %2664 = vst [vmem:[%s456 + $0x360] sm:$0xff] %v2145
        %2665 = vst.msk [vmem:[%s456 + $0x368] sm:$0xff] %vm552, %v2425
        %2666 = vst [vmem:[%s456 + $0x370] sm:$0xff] %v1846
        %2667 = vst [vmem:[%s456 + $0x378] sm:$0xff] %v1848
        %2668 = vst [vmem:[%s456 + $0x380] sm:$0xff] %v2149
        %2669 = vst [vmem:[%s456 + $0x388] sm:$0xff] %v2151
        %2670 = vst.msk [vmem:[%s456 + $0x390] sm:$0xff] %vm552, %v2430
        %2671 = vst [vmem:[%s456 + $0x398] sm:$0xff] %v1850
        %2672 = vst [vmem:[%s456 + $0x3a0] sm:$0xff] %v1852
        %2673 = vst [vmem:[%s456 + $0x3a8] sm:$0xff] %v2153
        %2674 = vst [vmem:[%s456 + $0x3b0] sm:$0xff] %v2155
        %2675 = vst.msk [vmem:[%s456 + $0x3b8] sm:$0xff] %vm552, %v2433
        %2676 = vst [vmem:[%s456 + $0x3c0] sm:$0xff] %v1856
        %2677 = vst [vmem:[%s456 + $0x3c8] sm:$0xff] %v1858
        %2678 = vst [vmem:[%s456 + $0x3d0] sm:$0xff] %v2159
        %2679 = vst [vmem:[%s456 + $0x3d8] sm:$0xff] %v2161
        %2680 = vst.msk [vmem:[%s456 + $0x3e0] sm:$0xff] %vm552, %v2438
        %2681 = vst [vmem:[%s456 + $0x3e8] sm:$0xff] %v1860
        %2682 = vst [vmem:[%s456 + $0x3f0] sm:$0xff] %v1862
        %2683 = vst [vmem:[%s456 + $0x3f8] sm:$0xff] %v2163
        %2684 = vst [vmem:[%s456 + $0x400] sm:$0xff] %v2165
        %2685 = vst.msk [vmem:[%s456 + $0x408] sm:$0xff] %vm552, %v2441
        %2686 = vst [vmem:[%s456 + $0x410] sm:$0xff] %v1866
        %2687 = vst [vmem:[%s456 + $0x418] sm:$0xff] %v1868
        %2688 = vst [vmem:[%s456 + $0x420] sm:$0xff] %v2169
        %2689 = vst [vmem:[%s456 + $0x428] sm:$0xff] %v2171
        %2690 = vst.msk [vmem:[%s456 + $0x430] sm:$0xff] %vm552, %v2446
        %2691 = vst [vmem:[%s456 + $0x438] sm:$0xff] %v1870
        %2692 = vst [vmem:[%s456 + $0x440] sm:$0xff] %v1872
        %2693 = vst [vmem:[%s456 + $0x448] sm:$0xff] %v2173
        %2694 = vst [vmem:[%s456 + $0x450] sm:$0xff] %v2175
        %2695 = vst.msk [vmem:[%s456 + $0x458] sm:$0xff] %vm552, %v2449
        %2696 = vst [vmem:[%s456 + $0x460] sm:$0xff] %v1876
        %2697 = vst [vmem:[%s456 + $0x468] sm:$0xff] %v1878
        %2698 = vst [vmem:[%s456 + $0x470] sm:$0xff] %v2179
        %2699 = vst [vmem:[%s456 + $0x478] sm:$0xff] %v2181
        %2700 = vst.msk [vmem:[%s456 + $0x480] sm:$0xff] %vm552, %v2454
        %2701 = vst [vmem:[%s456 + $0x488] sm:$0xff] %v1880
        %2702 = vst [vmem:[%s456 + $0x490] sm:$0xff] %v1882
        %2703 = vst [vmem:[%s456 + $0x498] sm:$0xff] %v2183
        %2704 = vst [vmem:[%s456 + $0x4a0] sm:$0xff] %v2185
        %2705 = vst.msk [vmem:[%s456 + $0x4a8] sm:$0xff] %vm552, %v2457
        %2706 = vst [vmem:[%s456 + $0x4b0] sm:$0xff] %v1886
        %2707 = vst [vmem:[%s456 + $0x4b8] sm:$0xff] %v1888
        %2708 = vst [vmem:[%s456 + $0x4c0] sm:$0xff] %v2189
        %2709 = vst [vmem:[%s456 + $0x4c8] sm:$0xff] %v2191
        %2710 = vst.msk [vmem:[%s456 + $0x4d0] sm:$0xff] %vm552, %v2462
        %2711 = vst [vmem:[%s456 + $0x4d8] sm:$0xff] %v1890
        %2712 = vst [vmem:[%s456 + $0x4e0] sm:$0xff] %v1892
        %2713 = vst [vmem:[%s456 + $0x4e8] sm:$0xff] %v2193
        %2714 = vst [vmem:[%s456 + $0x4f0] sm:$0xff] %v2195
        %2715 = vst.msk [vmem:[%s456 + $0x4f8] sm:$0xff] %vm552, %v2465
        %2716 = vst [vmem:[%s456 + $0x500] sm:$0xff] %v1896
        %2717 = vst [vmem:[%s456 + $0x508] sm:$0xff] %v1898
        %2718 = vst [vmem:[%s456 + $0x510] sm:$0xff] %v2199
        %2719 = vst [vmem:[%s456 + $0x518] sm:$0xff] %v2201
        %2720 = vst.msk [vmem:[%s456 + $0x520] sm:$0xff] %vm552, %v2470
        %2721 = vst [vmem:[%s456 + $0x528] sm:$0xff] %v1900
        %2722 = vst [vmem:[%s456 + $0x530] sm:$0xff] %v1902
        %2723 = vst [vmem:[%s456 + $0x538] sm:$0xff] %v2203
        %2724 = vst [vmem:[%s456 + $0x540] sm:$0xff] %v2205
        %2725 = vst.msk [vmem:[%s456 + $0x548] sm:$0xff] %vm552, %v2473
        %2726 = vst [vmem:[%s456 + $0x550] sm:$0xff] %v1906
        %2727 = vst [vmem:[%s456 + $0x558] sm:$0xff] %v1908
        %2728 = vst [vmem:[%s456 + $0x560] sm:$0xff] %v2209
        %2729 = vst [vmem:[%s456 + $0x568] sm:$0xff] %v2211
        %2730 = vst.msk [vmem:[%s456 + $0x570] sm:$0xff] %vm552, %v2478
        %2731 = vst [vmem:[%s456 + $0x578] sm:$0xff] %v1910
        %2732 = vst [vmem:[%s456 + $0x580] sm:$0xff] %v1912
        %2733 = vst [vmem:[%s456 + $0x588] sm:$0xff] %v2213
        %2734 = vst [vmem:[%s456 + $0x590] sm:$0xff] %v2215
        %2735 = vst.msk [vmem:[%s456 + $0x598] sm:$0xff] %vm552, %v2481
        %2736 = vst [vmem:[%s456 + $0x5a0] sm:$0xff] %v1916
        %2737 = vst [vmem:[%s456 + $0x5a8] sm:$0xff] %v1918
        %2738 = vst [vmem:[%s456 + $0x5b0] sm:$0xff] %v2219
        %2739 = vst [vmem:[%s456 + $0x5b8] sm:$0xff] %v2221
        %2740 = vst.msk [vmem:[%s456 + $0x5c0] sm:$0xff] %vm552, %v2486
        %2741 = vst [vmem:[%s456 + $0x5c8] sm:$0xff] %v1920
        %2742 = vst [vmem:[%s456 + $0x5d0] sm:$0xff] %v1922
        %2743 = vst [vmem:[%s456 + $0x5d8] sm:$0xff] %v2223
        %2744 = vst [vmem:[%s456 + $0x5e0] sm:$0xff] %v2225
        %2745 = vst.msk [vmem:[%s456 + $0x5e8] sm:$0xff] %vm552, %v2489
        %2746 = vst [vmem:[%s456 + $0x5f0] sm:$0xff] %v1926
        %2747 = vst [vmem:[%s456 + $0x5f8] sm:$0xff] %v1928
        %2748 = vst [vmem:[%s456 + $0x600] sm:$0xff] %v2229
        %2749 = vst [vmem:[%s456 + $0x608] sm:$0xff] %v2231
        %2750 = vst.msk [vmem:[%s456 + $0x610] sm:$0xff] %vm552, %v2494
        %2751 = vst [vmem:[%s456 + $0x618] sm:$0xff] %v1930
        %2752 = vst [vmem:[%s456 + $0x620] sm:$0xff] %v1932
        %2753 = vst [vmem:[%s456 + $0x628] sm:$0xff] %v2233
        %2754 = vst [vmem:[%s456 + $0x630] sm:$0xff] %v2235
        %2755 = vst.msk [vmem:[%s456 + $0x638] sm:$0xff] %vm552, %v2497
        %2756 = vst [vmem:[%s456 + $0x640] sm:$0xff] %v1936
        %2757 = vst [vmem:[%s456 + $0x648] sm:$0xff] %v1938
        %2758 = vst [vmem:[%s456 + $0x650] sm:$0xff] %v2239
        %2759 = vst [vmem:[%s456 + $0x658] sm:$0xff] %v2241
        %2760 = vst.msk [vmem:[%s456 + $0x660] sm:$0xff] %vm552, %v2502
        %2761 = vst [vmem:[%s456 + $0x668] sm:$0xff] %v1940
        %2762 = vst [vmem:[%s456 + $0x670] sm:$0xff] %v1942
        %2763 = vst [vmem:[%s456 + $0x678] sm:$0xff] %v2243
        %2764 = vst [vmem:[%s456 + $0x680] sm:$0xff] %v2245
        %2765 = vst.msk [vmem:[%s456 + $0x688] sm:$0xff] %vm552, %v2505
        %2766 = vst [vmem:[%s456 + $0x690] sm:$0xff] %v1946
        %2767 = vst [vmem:[%s456 + $0x698] sm:$0xff] %v1948
        %2768 = vst [vmem:[%s456 + $0x6a0] sm:$0xff] %v2249
        %2769 = vst [vmem:[%s456 + $0x6a8] sm:$0xff] %v2251
        %2770 = vst.msk [vmem:[%s456 + $0x6b0] sm:$0xff] %vm552, %v2510
        %2771 = vst [vmem:[%s456 + $0x6b8] sm:$0xff] %v1950
        %2772 = vst [vmem:[%s456 + $0x6c0] sm:$0xff] %v1952
        %2773 = vst [vmem:[%s456 + $0x6c8] sm:$0xff] %v2253
        %2774 = vst [vmem:[%s456 + $0x6d0] sm:$0xff] %v2255
        %2775 = vst.msk [vmem:[%s456 + $0x6d8] sm:$0xff] %vm552, %v2513
        %2776 = vst [vmem:[%s456 + $0x6e0] sm:$0xff] %v1956
        %2777 = vst [vmem:[%s456 + $0x6e8] sm:$0xff] %v1958
        %2778 = vst [vmem:[%s456 + $0x6f0] sm:$0xff] %v2259
        %2779 = vst [vmem:[%s456 + $0x6f8] sm:$0xff] %v2261
        %2780 = vst.msk [vmem:[%s456 + $0x700] sm:$0xff] %vm552, %v2518
        %2781 = vst [vmem:[%s456 + $0x708] sm:$0xff] %v1960
        %2782 = vst [vmem:[%s456 + $0x710] sm:$0xff] %v1962
        %2783 = vst [vmem:[%s456 + $0x718] sm:$0xff] %v2263
        %2784 = vst [vmem:[%s456 + $0x720] sm:$0xff] %v2265
        %2785 = vst.msk [vmem:[%s456 + $0x728] sm:$0xff] %vm552, %v2521
        %2786 = vst [vmem:[%s456 + $0x730] sm:$0xff] %v1966
        %2787 = vst [vmem:[%s456 + $0x738] sm:$0xff] %v1968
        %2788 = vst [vmem:[%s456 + $0x740] sm:$0xff] %v2269
        %2789 = vst [vmem:[%s456 + $0x748] sm:$0xff] %v2271
        %2790 = vst.msk [vmem:[%s456 + $0x750] sm:$0xff] %vm552, %v2526
        %2791 = vst [vmem:[%s456 + $0x758] sm:$0xff] %v1970
        %2792 = vst [vmem:[%s456 + $0x760] sm:$0xff] %v1972
        %2793 = vst [vmem:[%s456 + $0x768] sm:$0xff] %v2273
        %2794 = vst [vmem:[%s456 + $0x770] sm:$0xff] %v2275
        %2795 = vst.msk [vmem:[%s456 + $0x778] sm:$0xff] %vm552, %v2529
        %2796 = vst [vmem:[%s456 + $0x780] sm:$0xff] %v1976
        %2797 = vst [vmem:[%s456 + $0x788] sm:$0xff] %v1978
        %2798 = vst [vmem:[%s456 + $0x790] sm:$0xff] %v2279
        %2799 = vst [vmem:[%s456 + $0x798] sm:$0xff] %v2281
        %2800 = vst.msk [vmem:[%s456 + $0x7a0] sm:$0xff] %vm552, %v2534
        %2801 = vst [vmem:[%s456 + $0x7a8] sm:$0xff] %v1980
        %2802 = vst [vmem:[%s456 + $0x7b0] sm:$0xff] %v1982
        %2803 = vst [vmem:[%s456 + $0x7b8] sm:$0xff] %v2283
        %2804 = vst [vmem:[%s456 + $0x7c0] sm:$0xff] %v2285
        %2805 = vst.msk [vmem:[%s456 + $0x7c8] sm:$0xff] %vm552, %v2537
        %2806 = vst [vmem:[%s456 + $0x7d0] sm:$0xff] %v1986
        %2807 = vst [vmem:[%s456 + $0x7d8] sm:$0xff] %v1988
        %2808 = vst [vmem:[%s456 + $0x7e0] sm:$0xff] %v2289
        %2809 = vst [vmem:[%s456 + $0x7e8] sm:$0xff] %v2291
        %2810 = vst.msk [vmem:[%s456 + $0x7f0] sm:$0xff] %vm552, %v2542
        %2811 = vst [vmem:[%s456 + $0x7f8] sm:$0xff] %v1990
        %2812 = vst [vmem:[%s456 + $0x800] sm:$0xff] %v1992
        %2813 = vst [vmem:[%s456 + $0x808] sm:$0xff] %v2293
        %2814 = vst [vmem:[%s456 + $0x810] sm:$0xff] %v2295
        %2815 = vst.msk [vmem:[%s456 + $0x818] sm:$0xff] %vm552, %v2545
        %2816 = vst [vmem:[%s456 + $0x820] sm:$0xff] %v1996
        %2817 = vst [vmem:[%s456 + $0x828] sm:$0xff] %v1998
        %2818 = vst [vmem:[%s456 + $0x830] sm:$0xff] %v2299
        %2819 = vst [vmem:[%s456 + $0x838] sm:$0xff] %v2301
        %2820 = vst.msk [vmem:[%s456 + $0x840] sm:$0xff] %vm552, %v2550
        %2821 = vst [vmem:[%s456 + $0x848] sm:$0x3] %v2000
        %2822 = vst [vmem:[%s456 + $0x850] sm:$0x3] %v2002
        %2823 = vst [vmem:[%s456 + $0x858] sm:$0x3] %v2303
        %2824 = vst [vmem:[%s456 + $0x860] sm:$0x3] %v2305
        %vm2825 = vcmask 386048
        %2826 = vst.msk [vmem:[%s456 + $0x868] sm:$0x3] %vm2825, %v2553
        %p2827 = scmp.lt.s32.totalorder %s26, 1
        %s2828 = scalar_select %p2827, %s26, 1
        %s2829 = smul.addr %s2828, 270
        %s2830 = smul.addr %s2829, 8
        %s2831 = scalar_lea.vmem %s11, %s2830
        // Predicated region
        $region85: #{tpu_custom_call.1} parent=63 // pred_check
          %p2832 = pneg %p280
        $region86: #{tpu_custom_call.1} parent=63 // pred_check_branch
          %2834 = sbr.rel (%p2832) target = $region88
        $region87: #{tpu_custom_call.1} parent=63 // pred_region
          _
        $region88: #{tpu_custom_call.1} parent=63 // pred_fallthru
          _
      $region64: #{tpu_custom_call.1} parent=5 // pred_fallthru
        _
      %p2835 = scmp.le.s32.totalorder 2, %s21
      // Predicated region
      $region89: #{tpu_custom_call.1} parent=5 // pred_check
        %p2836 = pneg %p2835
      $region90: #{tpu_custom_call.1} parent=5 // pred_check_branch
        %2838 = sbr.rel (%p2836) target = $region92
      $region91: #{tpu_custom_call.1} parent=5 // pred_region
        %s2839 = ssub.s32 %s21, 2
        // Predicated region
        $region93: #{tpu_custom_call.1} parent=91 // pred_check
          %p2840 = pneg %p286
        $region94: #{tpu_custom_call.1} parent=91 // pred_check_branch
          %2842 = sbr.rel (%p2840) target = $region96
        $region95: #{tpu_custom_call.1} parent=91 // pred_region
          %p2843 = scmp.lt.s32.totalorder %s27, 1
          %s2844 = scalar_select %p2843, %s27, 1
          %s2845 = smul.addr %s2844, 270
          %s2846 = smul.addr %s2845, 8
          %s2847 = scalar_lea.vmem %s11, %s2846
        $region96: #{tpu_custom_call.1} parent=91 // pred_fallthru
          _
      $region92: #{tpu_custom_call.1} parent=5 // pred_fallthru
        _
    $region6: #{tpu_custom_call.1} parent=1 // loop_footer
      %s25 = sadd.s32 1, %s21
    $region7: #{tpu_custom_call.1} parent=1 // loop_footer_branch
      %20 = sbr.rel target = $region3
    $region8: #{tpu_custom_call.1} parent=1 // loop_exit
      _
    %2848 = vsyncpa [#allocation4], 1
    %s2849 = scalar_lea.sflag [#allocation4], 1
    %2850 = vsyncpa %s2849, 1
    %2851 = vsyncpa [#allocation6], 1
    %2852 = vsyncpa [#allocation9], 1

</llo_original>
